<compile_context>
chip_gen: v5e
topology: v5e:2x2
jax: 0.10.0
libtpu: 0.0.40
codegen_flags: <defaults>
</compile_context>

<pallas_src>
import math

import jax
import jax.numpy as jnp
from jax.experimental import pallas as pl
from jax.experimental.pallas import tpu as pltpu  # noqa: F401  (TPU backend)

D_MODEL = 32
N_HEAD = 4
HEAD_DIM = D_MODEL // N_HEAD
SEQ = 8
BATCH = 2
EPS = 1e-5


def _layernorm(x, gamma, beta):
    mu = jnp.mean(x, axis=-1, keepdims=True)
    var = jnp.mean((x - mu) ** 2, axis=-1, keepdims=True)
    return (x - mu) * jax.lax.rsqrt(var + EPS) * gamma + beta


def _gelu_exact(x):
    # PyTorch nn.GELU() default: exact erf-based GELU.
    return 0.5 * x * (1.0 + jax.lax.erf(x / jnp.sqrt(2.0).astype(x.dtype)))


def _block_kernel(x_ref,
                  ln1_g_ref, ln1_b_ref,
                  wq_ref, bq_ref, wk_ref, bk_ref, wv_ref, bv_ref,
                  wo_ref, bo_ref,
                  ln2_g_ref, ln2_b_ref,
                  w1_ref, b1_ref, w2_ref, b2_ref,
                  o_ref):
    x = x_ref[...]                                      # (S, B, D) f32
    # Batch-major flatten inside VMEM (no wrapper transpose / extra XLA launch).
    xb = jnp.concatenate([x[:, b, :] for b in range(BATCH)], axis=0)   # (B*S, D)

    # ----- attention branch -------------------------------------------------
    ln1 = _layernorm(xb, ln1_g_ref[...], ln1_b_ref[...])
    # Weights are pre-transposed to (D, D); Wq/bq already carry 1/sqrt(HD).
    q = jnp.dot(ln1, wq_ref[...], preferred_element_type=jnp.float32) + bq_ref[...]
    k = jnp.dot(ln1, wk_ref[...], preferred_element_type=jnp.float32) + bk_ref[...]
    v = jnp.dot(ln1, wv_ref[...], preferred_element_type=jnp.float32) + bv_ref[...]

    # Score tiles for every (batch, head) stacked along sublanes -> one softmax.
    tiles = []
    for b in range(BATCH):
        r0 = b * SEQ
        for h in range(N_HEAD):
            c0 = h * HEAD_DIM
            qh = q[r0:r0 + SEQ, c0:c0 + HEAD_DIM]
            kh = k[r0:r0 + SEQ, c0:c0 + HEAD_DIM]
            tiles.append(jnp.dot(qh, kh.T, preferred_element_type=jnp.float32))
    s = jnp.concatenate(tiles, axis=0)                  # (B*H*S, S)
    s = s - jnp.max(s, axis=-1, keepdims=True)
    p = jnp.exp(s)
    p = p * pl.reciprocal(jnp.sum(p, axis=-1, keepdims=True), approx=True)
    # TODO(synk): attention-weight dropout (p=0.1) is identity in eval mode.

    # PV + out_proj folded per head (no head-output concat).
    wo = wo_ref[...]                                    # (D, D), pre-transposed
    outs = []
    for b in range(BATCH):
        r0 = b * SEQ
        acc = jnp.zeros((SEQ, D_MODEL), jnp.float32)
        for h in range(N_HEAD):
            c0 = h * HEAD_DIM
            t0 = (b * N_HEAD + h) * SEQ
            ph = p[t0:t0 + SEQ, :]                      # (S, S)
            vh = v[r0:r0 + SEQ, c0:c0 + HEAD_DIM]       # (S, HD)
            pv = jnp.dot(ph, vh, preferred_element_type=jnp.float32)
            acc = acc + jnp.dot(pv, wo[c0:c0 + HEAD_DIM, :],
                                preferred_element_type=jnp.float32)
        outs.append(acc)
    attn = jnp.concatenate(outs, axis=0) + bo_ref[...]  # (B*S, D)
    x1 = xb + attn

    # ----- MLP branch -------------------------------------------------------
    ln2 = _layernorm(x1, ln2_g_ref[...], ln2_b_ref[...])
    h1 = jnp.dot(ln2, w1_ref[...], preferred_element_type=jnp.float32) + b1_ref[...]
    h1 = _gelu_exact(h1)
    mlp = jnp.dot(h1, w2_ref[...], preferred_element_type=jnp.float32) + b2_ref[...]
    y = x1 + mlp                                        # (B*S, D), batch-major

    # Back to (S, B, D) with a single full store.
    o_ref[...] = jnp.stack([y[b * SEQ:(b + 1) * SEQ, :] for b in range(BATCH)],
                           axis=1)


_WEIGHT_ORDER = ("ln1_g", "ln1_b",
                 "wq", "bq", "wk", "bk", "wv", "bv",
                 "wo", "bo",
                 "ln2_g", "ln2_b",
                 "w1", "b1", "w2", "b2")


def prepare_params(p):
    """One-time conversion of PyTorch-layout params to kernel layout:
    pre-transposed weights, split in_proj, 1/sqrt(head_dim) folded into Q."""
    scale = 1.0 / math.sqrt(HEAD_DIM)
    D = D_MODEL
    return {
        "ln1_g": p["ln1_g"].reshape(1, D),
        "ln1_b": p["ln1_b"].reshape(1, D),
        "wq": p["in_w"][0:D, :].T * scale,
        "bq": (p["in_b"][0:D] * scale).reshape(1, D),
        "wk": p["in_w"][D:2 * D, :].T,
        "bk": p["in_b"][D:2 * D].reshape(1, D),
        "wv": p["in_w"][2 * D:3 * D, :].T,
        "bv": p["in_b"][2 * D:3 * D].reshape(1, D),
        "wo": p["out_w"].T,
        "bo": p["out_b"].reshape(1, D),
        "ln2_g": p["ln2_g"].reshape(1, D),
        "ln2_b": p["ln2_b"].reshape(1, D),
        "w1": p["w1"].T,                 # (D, 4D)
        "b1": p["b1"].reshape(1, 4 * D),
        "w2": p["w2"].T,                 # (4D, D)
        "b2": p["b2"].reshape(1, D),
    }


@jax.jit
def residual_attention_block(x_sbd, prep):
    """x_sbd: (seq, batch, d_model) float32 — PyTorch MultiheadAttention layout.

    Single pallas_call, no grid: every operand (<60 KiB total) lives whole in
    VMEM.  On dual-TC v7x a grid=(B,) 'parallel' split could be benchmarked,
    but at S=8/D=32 the collapsed variant avoids per-step pipeline overhead.
    """
    ws = [prep[n] for n in _WEIGHT_ORDER]
    return pl.pallas_call(
        _block_kernel,
        out_shape=jax.ShapeDtypeStruct(x_sbd.shape, jnp.float32),
    )(x_sbd, *ws)


def init_params(key):
    """Parameters in native PyTorch layouts (as nn.MultiheadAttention / Linear)."""
    ks = jax.random.split(key, 6)
    std = 0.02
    return {
        "ln1_g": jnp.ones((D_MODEL,), jnp.float32),
        "ln1_b": jnp.zeros((D_MODEL,), jnp.float32),
        "in_w": jax.random.normal(ks[0], (3 * D_MODEL, D_MODEL), jnp.float32) * std,
        "in_b": jax.random.normal(ks[1], (3 * D_MODEL,), jnp.float32) * std,
        "out_w": jax.random.normal(ks[2], (D_MODEL, D_MODEL), jnp.float32) * std,
        "out_b": jnp.zeros((D_MODEL,), jnp.float32),
        "ln2_g": jnp.ones((D_MODEL,), jnp.float32),
        "ln2_b": jnp.zeros((D_MODEL,), jnp.float32),
        "w1": jax.random.normal(ks[3], (4 * D_MODEL, D_MODEL), jnp.float32) * std,
        "b1": jax.random.normal(ks[4], (4 * D_MODEL,), jnp.float32) * std,
        "w2": jax.random.normal(ks[5], (D_MODEL, 4 * D_MODEL), jnp.float32) * std,
        "b2": jnp.zeros((D_MODEL,), jnp.float32),
    }


def _reference(x_sbd, p):
    """Pure-JAX reference of the PyTorch module (per-batch, vmapped)."""
    def one(x):  # x: (S, D)
        ln1 = _layernorm(x, p["ln1_g"], p["ln1_b"])
        qkv = ln1 @ p["in_w"].T + p["in_b"]
        q, k, v = jnp.split(qkv, 3, axis=-1)
        qh = q.reshape(SEQ, N_HEAD, HEAD_DIM).transpose(1, 0, 2) / math.sqrt(HEAD_DIM)
        kh = k.reshape(SEQ, N_HEAD, HEAD_DIM).transpose(1, 0, 2)
        vh = v.reshape(SEQ, N_HEAD, HEAD_DIM).transpose(1, 0, 2)
        s = jnp.einsum("hqd,hkd->hqk", qh, kh)
        pw = jax.nn.softmax(s, axis=-1)
        o = jnp.einsum("hqk,hkd->hqd", pw, vh).transpose(1, 0, 2).reshape(SEQ, D_MODEL)
        attn = o @ p["out_w"].T + p["out_b"]
        x1 = x + attn
        ln2 = _layernorm(x1, p["ln2_g"], p["ln2_b"])
        h1 = _gelu_exact(ln2 @ p["w1"].T + p["b1"])
        return x1 + (h1 @ p["w2"].T + p["b2"])

    xb = jnp.transpose(x_sbd, (1, 0, 2))
    return jnp.transpose(jax.vmap(one)(xb), (1, 0, 2))


if __name__ == "__main__":
    key = jax.random.PRNGKey(0)
    k_x, k_p = jax.random.split(key)
    params = init_params(k_p)
    prep = prepare_params(params)            # one-time weight re-layout
    x = jax.random.normal(k_x, (SEQ, BATCH, D_MODEL), jnp.float32)

    out = jax.block_until_ready(residual_attention_block(x, prep))
    ref = jax.block_until_ready(_reference(x, params))

    assert out.shape == (SEQ, BATCH, D_MODEL)
    assert jnp.allclose(out, ref, atol=1e-4, rtol=1e-4), "mismatch vs JAX reference"
    print("KERNEL_OK")
</pallas_src>

<mosaic_0001>
module attributes {stable_mosaic.version = 11 : i64} {
  func.func @_block_kernel(%arg0: memref<8x2x32xf32, #tpu.memory_space<vmem>>, %arg1: memref<1x32xf32, #tpu.memory_space<vmem>>, %arg2: memref<1x32xf32, #tpu.memory_space<vmem>>, %arg3: memref<32x32xf32, #tpu.memory_space<vmem>>, %arg4: memref<1x32xf32, #tpu.memory_space<vmem>>, %arg5: memref<32x32xf32, #tpu.memory_space<vmem>>, %arg6: memref<1x32xf32, #tpu.memory_space<vmem>>, %arg7: memref<32x32xf32, #tpu.memory_space<vmem>>, %arg8: memref<1x32xf32, #tpu.memory_space<vmem>>, %arg9: memref<32x32xf32, #tpu.memory_space<vmem>>, %arg10: memref<1x32xf32, #tpu.memory_space<vmem>>, %arg11: memref<1x32xf32, #tpu.memory_space<vmem>>, %arg12: memref<1x32xf32, #tpu.memory_space<vmem>>, %arg13: memref<32x128xf32, #tpu.memory_space<vmem>>, %arg14: memref<1x128xf32, #tpu.memory_space<vmem>>, %arg15: memref<128x32xf32, #tpu.memory_space<vmem>>, %arg16: memref<1x32xf32, #tpu.memory_space<vmem>>, %arg17: memref<8x2x32xf32, #tpu.memory_space<vmem>>) attributes {dimension_semantics = [], scalar_prefetch = 0 : i64, scratch_operands = 0 : i64, tpu.core_type = #tpu.core_type<tc>} {
    %c0 = arith.constant 0 : index
    %c0_0 = arith.constant 0 : index
    %c0_1 = arith.constant 0 : index
    %0 = vector.load %arg0[%c0, %c0_0, %c0_1] : memref<8x2x32xf32, #tpu.memory_space<vmem>>, vector<8x2x32xf32>
    %1 = vector.extract_strided_slice %0 {offsets = [0, 0, 0], sizes = [8, 1, 32], strides = [1, 1, 1]} : vector<8x2x32xf32> to vector<8x1x32xf32>
    %2 = vector.shape_cast %1 : vector<8x1x32xf32> to vector<8x32xf32>
    %3 = vector.extract_strided_slice %0 {offsets = [0, 1, 0], sizes = [8, 1, 32], strides = [1, 1, 1]} : vector<8x2x32xf32> to vector<8x1x32xf32>
    %4 = vector.shape_cast %3 : vector<8x1x32xf32> to vector<8x32xf32>
    %5 = tpu.concatenate %2, %4 in 0 : vector<8x32xf32>, vector<8x32xf32> -> vector<16x32xf32>
    %c0_2 = arith.constant 0 : index
    %c0_3 = arith.constant 0 : index
    %6 = vector.load %arg1[%c0_2, %c0_3] : memref<1x32xf32, #tpu.memory_space<vmem>>, vector<1x32xf32>
    %c0_4 = arith.constant 0 : index
    %c0_5 = arith.constant 0 : index
    %7 = vector.load %arg2[%c0_4, %c0_5] : memref<1x32xf32, #tpu.memory_space<vmem>>, vector<1x32xf32>
    %cst = arith.constant dense<0.000000e+00> : vector<16xf32>
    %8 = vector.multi_reduction <add>, %5, %cst [1] : vector<16x32xf32> to vector<16xf32>
    %9 = vector.shape_cast %8 : vector<16xf32> to vector<16x1xf32>
    %cst_6 = arith.constant 3.200000e+01 : f32
    %10 = vector.broadcast %cst_6 : f32 to vector<16x1xf32>
    %11 = arith.divf %9, %10 : vector<16x1xf32>
    %12 = vector.broadcast %11 : vector<16x1xf32> to vector<16x32xf32>
    %13 = arith.subf %5, %12 : vector<16x32xf32>
    %14 = arith.mulf %13, %13 : vector<16x32xf32>
    %cst_7 = arith.constant dense<0.000000e+00> : vector<16xf32>
    %15 = vector.multi_reduction <add>, %14, %cst_7 [1] : vector<16x32xf32> to vector<16xf32>
    %16 = vector.shape_cast %15 : vector<16xf32> to vector<16x1xf32>
    %cst_8 = arith.constant 3.200000e+01 : f32
    %17 = vector.broadcast %cst_8 : f32 to vector<16x1xf32>
    %18 = arith.divf %16, %17 : vector<16x1xf32>
    %19 = vector.broadcast %11 : vector<16x1xf32> to vector<16x32xf32>
    %20 = arith.subf %5, %19 : vector<16x32xf32>
    %cst_9 = arith.constant 9.99999974E-6 : f32
    %21 = vector.broadcast %cst_9 : f32 to vector<16x1xf32>
    %22 = arith.addf %18, %21 : vector<16x1xf32>
    %23 = math.rsqrt %22 : vector<16x1xf32>
    %24 = vector.broadcast %23 : vector<16x1xf32> to vector<16x32xf32>
    %25 = arith.mulf %20, %24 : vector<16x32xf32>
    %26 = vector.broadcast %6 : vector<1x32xf32> to vector<16x32xf32>
    %27 = arith.mulf %25, %26 : vector<16x32xf32>
    %28 = vector.broadcast %7 : vector<1x32xf32> to vector<16x32xf32>
    %29 = arith.addf %27, %28 : vector<16x32xf32>
    %c0_10 = arith.constant 0 : index
    %c0_11 = arith.constant 0 : index
    %30 = vector.load %arg3[%c0_10, %c0_11] : memref<32x32xf32, #tpu.memory_space<vmem>>, vector<32x32xf32>
    %cst_12 = arith.constant dense<0.000000e+00> : vector<16x32xf32>
    %31 = tpu.matmul %29, %30, %cst_12 {dimension_numbers = #tpu.dot_dimension_numbers<[1], [0], [0], [1], [0, 0, 1, 1], [], []>} : vector<16x32xf32>, vector<32x32xf32>, vector<16x32xf32> -> vector<16x32xf32>
    %c0_13 = arith.constant 0 : index
    %c0_14 = arith.constant 0 : index
    %32 = vector.load %arg4[%c0_13, %c0_14] : memref<1x32xf32, #tpu.memory_space<vmem>>, vector<1x32xf32>
    %33 = vector.broadcast %32 : vector<1x32xf32> to vector<16x32xf32>
    %34 = arith.addf %31, %33 : vector<16x32xf32>
    %c0_15 = arith.constant 0 : index
    %c0_16 = arith.constant 0 : index
    %35 = vector.load %arg5[%c0_15, %c0_16] : memref<32x32xf32, #tpu.memory_space<vmem>>, vector<32x32xf32>
    %cst_17 = arith.constant dense<0.000000e+00> : vector<16x32xf32>
    %36 = tpu.matmul %29, %35, %cst_17 {dimension_numbers = #tpu.dot_dimension_numbers<[1], [0], [0], [1], [0, 0, 1, 1], [], []>} : vector<16x32xf32>, vector<32x32xf32>, vector<16x32xf32> -> vector<16x32xf32>
    %c0_18 = arith.constant 0 : index
    %c0_19 = arith.constant 0 : index
    %37 = vector.load %arg6[%c0_18, %c0_19] : memref<1x32xf32, #tpu.memory_space<vmem>>, vector<1x32xf32>
    %38 = vector.broadcast %37 : vector<1x32xf32> to vector<16x32xf32>
    %39 = arith.addf %36, %38 : vector<16x32xf32>
    %c0_20 = arith.constant 0 : index
    %c0_21 = arith.constant 0 : index
    %40 = vector.load %arg7[%c0_20, %c0_21] : memref<32x32xf32, #tpu.memory_space<vmem>>, vector<32x32xf32>
    %cst_22 = arith.constant dense<0.000000e+00> : vector<16x32xf32>
    %41 = tpu.matmul %29, %40, %cst_22 {dimension_numbers = #tpu.dot_dimension_numbers<[1], [0], [0], [1], [0, 0, 1, 1], [], []>} : vector<16x32xf32>, vector<32x32xf32>, vector<16x32xf32> -> vector<16x32xf32>
    %c0_23 = arith.constant 0 : index
    %c0_24 = arith.constant 0 : index
    %42 = vector.load %arg8[%c0_23, %c0_24] : memref<1x32xf32, #tpu.memory_space<vmem>>, vector<1x32xf32>
    %43 = vector.broadcast %42 : vector<1x32xf32> to vector<16x32xf32>
    %44 = arith.addf %41, %43 : vector<16x32xf32>
    %45 = vector.extract_strided_slice %34 {offsets = [0, 0], sizes = [8, 8], strides = [1, 1]} : vector<16x32xf32> to vector<8x8xf32>
    %46 = vector.extract_strided_slice %39 {offsets = [0, 0], sizes = [8, 8], strides = [1, 1]} : vector<16x32xf32> to vector<8x8xf32>
    %47 = tpu.transpose %46, [1, 0] : vector<8x8xf32> -> vector<8x8xf32>
    %cst_25 = arith.constant dense<0.000000e+00> : vector<8x8xf32>
    %48 = tpu.matmul %45, %47, %cst_25 {dimension_numbers = #tpu.dot_dimension_numbers<[1], [0], [0], [1], [0, 0, 1, 1], [], []>} : vector<8x8xf32>, vector<8x8xf32>, vector<8x8xf32> -> vector<8x8xf32>
    %49 = vector.extract_strided_slice %34 {offsets = [0, 8], sizes = [8, 8], strides = [1, 1]} : vector<16x32xf32> to vector<8x8xf32>
    %50 = vector.extract_strided_slice %39 {offsets = [0, 8], sizes = [8, 8], strides = [1, 1]} : vector<16x32xf32> to vector<8x8xf32>
    %51 = tpu.transpose %50, [1, 0] : vector<8x8xf32> -> vector<8x8xf32>
    %cst_26 = arith.constant dense<0.000000e+00> : vector<8x8xf32>
    %52 = tpu.matmul %49, %51, %cst_26 {dimension_numbers = #tpu.dot_dimension_numbers<[1], [0], [0], [1], [0, 0, 1, 1], [], []>} : vector<8x8xf32>, vector<8x8xf32>, vector<8x8xf32> -> vector<8x8xf32>
    %53 = vector.extract_strided_slice %34 {offsets = [0, 16], sizes = [8, 8], strides = [1, 1]} : vector<16x32xf32> to vector<8x8xf32>
    %54 = vector.extract_strided_slice %39 {offsets = [0, 16], sizes = [8, 8], strides = [1, 1]} : vector<16x32xf32> to vector<8x8xf32>
    %55 = tpu.transpose %54, [1, 0] : vector<8x8xf32> -> vector<8x8xf32>
    %cst_27 = arith.constant dense<0.000000e+00> : vector<8x8xf32>
    %56 = tpu.matmul %53, %55, %cst_27 {dimension_numbers = #tpu.dot_dimension_numbers<[1], [0], [0], [1], [0, 0, 1, 1], [], []>} : vector<8x8xf32>, vector<8x8xf32>, vector<8x8xf32> -> vector<8x8xf32>
    %57 = vector.extract_strided_slice %34 {offsets = [0, 24], sizes = [8, 8], strides = [1, 1]} : vector<16x32xf32> to vector<8x8xf32>
    %58 = vector.extract_strided_slice %39 {offsets = [0, 24], sizes = [8, 8], strides = [1, 1]} : vector<16x32xf32> to vector<8x8xf32>
    %59 = tpu.transpose %58, [1, 0] : vector<8x8xf32> -> vector<8x8xf32>
    %cst_28 = arith.constant dense<0.000000e+00> : vector<8x8xf32>
    %60 = tpu.matmul %57, %59, %cst_28 {dimension_numbers = #tpu.dot_dimension_numbers<[1], [0], [0], [1], [0, 0, 1, 1], [], []>} : vector<8x8xf32>, vector<8x8xf32>, vector<8x8xf32> -> vector<8x8xf32>
    %61 = vector.extract_strided_slice %34 {offsets = [8, 0], sizes = [8, 8], strides = [1, 1]} : vector<16x32xf32> to vector<8x8xf32>
    %62 = vector.extract_strided_slice %39 {offsets = [8, 0], sizes = [8, 8], strides = [1, 1]} : vector<16x32xf32> to vector<8x8xf32>
    %63 = tpu.transpose %62, [1, 0] : vector<8x8xf32> -> vector<8x8xf32>
    %cst_29 = arith.constant dense<0.000000e+00> : vector<8x8xf32>
    %64 = tpu.matmul %61, %63, %cst_29 {dimension_numbers = #tpu.dot_dimension_numbers<[1], [0], [0], [1], [0, 0, 1, 1], [], []>} : vector<8x8xf32>, vector<8x8xf32>, vector<8x8xf32> -> vector<8x8xf32>
    %65 = vector.extract_strided_slice %34 {offsets = [8, 8], sizes = [8, 8], strides = [1, 1]} : vector<16x32xf32> to vector<8x8xf32>
    %66 = vector.extract_strided_slice %39 {offsets = [8, 8], sizes = [8, 8], strides = [1, 1]} : vector<16x32xf32> to vector<8x8xf32>
    %67 = tpu.transpose %66, [1, 0] : vector<8x8xf32> -> vector<8x8xf32>
    %cst_30 = arith.constant dense<0.000000e+00> : vector<8x8xf32>
    %68 = tpu.matmul %65, %67, %cst_30 {dimension_numbers = #tpu.dot_dimension_numbers<[1], [0], [0], [1], [0, 0, 1, 1], [], []>} : vector<8x8xf32>, vector<8x8xf32>, vector<8x8xf32> -> vector<8x8xf32>
    %69 = vector.extract_strided_slice %34 {offsets = [8, 16], sizes = [8, 8], strides = [1, 1]} : vector<16x32xf32> to vector<8x8xf32>
    %70 = vector.extract_strided_slice %39 {offsets = [8, 16], sizes = [8, 8], strides = [1, 1]} : vector<16x32xf32> to vector<8x8xf32>
    %71 = tpu.transpose %70, [1, 0] : vector<8x8xf32> -> vector<8x8xf32>
    %cst_31 = arith.constant dense<0.000000e+00> : vector<8x8xf32>
    %72 = tpu.matmul %69, %71, %cst_31 {dimension_numbers = #tpu.dot_dimension_numbers<[1], [0], [0], [1], [0, 0, 1, 1], [], []>} : vector<8x8xf32>, vector<8x8xf32>, vector<8x8xf32> -> vector<8x8xf32>
    %73 = vector.extract_strided_slice %34 {offsets = [8, 24], sizes = [8, 8], strides = [1, 1]} : vector<16x32xf32> to vector<8x8xf32>
    %74 = vector.extract_strided_slice %39 {offsets = [8, 24], sizes = [8, 8], strides = [1, 1]} : vector<16x32xf32> to vector<8x8xf32>
    %75 = tpu.transpose %74, [1, 0] : vector<8x8xf32> -> vector<8x8xf32>
    %cst_32 = arith.constant dense<0.000000e+00> : vector<8x8xf32>
    %76 = tpu.matmul %73, %75, %cst_32 {dimension_numbers = #tpu.dot_dimension_numbers<[1], [0], [0], [1], [0, 0, 1, 1], [], []>} : vector<8x8xf32>, vector<8x8xf32>, vector<8x8xf32> -> vector<8x8xf32>
    %77 = tpu.concatenate %48, %52, %56, %60, %64, %68, %72, %76 in 0 : vector<8x8xf32>, vector<8x8xf32>, vector<8x8xf32>, vector<8x8xf32>, vector<8x8xf32>, vector<8x8xf32>, vector<8x8xf32>, vector<8x8xf32> -> vector<64x8xf32>
    %cst_33 = arith.constant dense<0xFF800000> : vector<64xf32>
    %78 = vector.multi_reduction <maximumf>, %77, %cst_33 [1] : vector<64x8xf32> to vector<64xf32>
    %79 = vector.shape_cast %78 : vector<64xf32> to vector<64x1xf32>
    %80 = vector.broadcast %79 : vector<64x1xf32> to vector<64x8xf32>
    %81 = arith.subf %77, %80 : vector<64x8xf32>
    %82 = math.exp %81 : vector<64x8xf32>
    %cst_34 = arith.constant dense<0.000000e+00> : vector<64xf32>
    %83 = vector.multi_reduction <add>, %82, %cst_34 [1] : vector<64x8xf32> to vector<64xf32>
    %84 = vector.shape_cast %83 : vector<64xf32> to vector<64x1xf32>
    %85 = tpu.reciprocal %84 {approx = true} : vector<64x1xf32> -> vector<64x1xf32>
    %86 = vector.broadcast %85 : vector<64x1xf32> to vector<64x8xf32>
    %87 = arith.mulf %82, %86 : vector<64x8xf32>
    %c0_35 = arith.constant 0 : index
    %c0_36 = arith.constant 0 : index
    %88 = vector.load %arg9[%c0_35, %c0_36] : memref<32x32xf32, #tpu.memory_space<vmem>>, vector<32x32xf32>
    %cst_37 = arith.constant 0.000000e+00 : f32
    %89 = vector.broadcast %cst_37 : f32 to vector<8x32xf32>
    %90 = vector.extract_strided_slice %87 {offsets = [0, 0], sizes = [8, 8], strides = [1, 1]} : vector<64x8xf32> to vector<8x8xf32>
    %91 = vector.extract_strided_slice %44 {offsets = [0, 0], sizes = [8, 8], strides = [1, 1]} : vector<16x32xf32> to vector<8x8xf32>
    %cst_38 = arith.constant dense<0.000000e+00> : vector<8x8xf32>
    %92 = tpu.matmul %90, %91, %cst_38 {dimension_numbers = #tpu.dot_dimension_numbers<[1], [0], [0], [1], [0, 0, 1, 1], [], []>} : vector<8x8xf32>, vector<8x8xf32>, vector<8x8xf32> -> vector<8x8xf32>
    %93 = vector.extract_strided_slice %88 {offsets = [0, 0], sizes = [8, 32], strides = [1, 1]} : vector<32x32xf32> to vector<8x32xf32>
    %cst_39 = arith.constant dense<0.000000e+00> : vector<8x32xf32>
    %94 = tpu.matmul %92, %93, %cst_39 {dimension_numbers = #tpu.dot_dimension_numbers<[1], [0], [0], [1], [0, 0, 1, 1], [], []>} : vector<8x8xf32>, vector<8x32xf32>, vector<8x32xf32> -> vector<8x32xf32>
    %95 = arith.addf %89, %94 : vector<8x32xf32>
    %96 = vector.extract_strided_slice %87 {offsets = [8, 0], sizes = [8, 8], strides = [1, 1]} : vector<64x8xf32> to vector<8x8xf32>
    %97 = vector.extract_strided_slice %44 {offsets = [0, 8], sizes = [8, 8], strides = [1, 1]} : vector<16x32xf32> to vector<8x8xf32>
    %cst_40 = arith.constant dense<0.000000e+00> : vector<8x8xf32>
    %98 = tpu.matmul %96, %97, %cst_40 {dimension_numbers = #tpu.dot_dimension_numbers<[1], [0], [0], [1], [0, 0, 1, 1], [], []>} : vector<8x8xf32>, vector<8x8xf32>, vector<8x8xf32> -> vector<8x8xf32>
    %99 = vector.extract_strided_slice %88 {offsets = [8, 0], sizes = [8, 32], strides = [1, 1]} : vector<32x32xf32> to vector<8x32xf32>
    %cst_41 = arith.constant dense<0.000000e+00> : vector<8x32xf32>
    %100 = tpu.matmul %98, %99, %cst_41 {dimension_numbers = #tpu.dot_dimension_numbers<[1], [0], [0], [1], [0, 0, 1, 1], [], []>} : vector<8x8xf32>, vector<8x32xf32>, vector<8x32xf32> -> vector<8x32xf32>
    %101 = arith.addf %95, %100 : vector<8x32xf32>
    %102 = vector.extract_strided_slice %87 {offsets = [16, 0], sizes = [8, 8], strides = [1, 1]} : vector<64x8xf32> to vector<8x8xf32>
    %103 = vector.extract_strided_slice %44 {offsets = [0, 16], sizes = [8, 8], strides = [1, 1]} : vector<16x32xf32> to vector<8x8xf32>
    %cst_42 = arith.constant dense<0.000000e+00> : vector<8x8xf32>
    %104 = tpu.matmul %102, %103, %cst_42 {dimension_numbers = #tpu.dot_dimension_numbers<[1], [0], [0], [1], [0, 0, 1, 1], [], []>} : vector<8x8xf32>, vector<8x8xf32>, vector<8x8xf32> -> vector<8x8xf32>
    %105 = vector.extract_strided_slice %88 {offsets = [16, 0], sizes = [8, 32], strides = [1, 1]} : vector<32x32xf32> to vector<8x32xf32>
    %cst_43 = arith.constant dense<0.000000e+00> : vector<8x32xf32>
    %106 = tpu.matmul %104, %105, %cst_43 {dimension_numbers = #tpu.dot_dimension_numbers<[1], [0], [0], [1], [0, 0, 1, 1], [], []>} : vector<8x8xf32>, vector<8x32xf32>, vector<8x32xf32> -> vector<8x32xf32>
    %107 = arith.addf %101, %106 : vector<8x32xf32>
    %108 = vector.extract_strided_slice %87 {offsets = [24, 0], sizes = [8, 8], strides = [1, 1]} : vector<64x8xf32> to vector<8x8xf32>
    %109 = vector.extract_strided_slice %44 {offsets = [0, 24], sizes = [8, 8], strides = [1, 1]} : vector<16x32xf32> to vector<8x8xf32>
    %cst_44 = arith.constant dense<0.000000e+00> : vector<8x8xf32>
    %110 = tpu.matmul %108, %109, %cst_44 {dimension_numbers = #tpu.dot_dimension_numbers<[1], [0], [0], [1], [0, 0, 1, 1], [], []>} : vector<8x8xf32>, vector<8x8xf32>, vector<8x8xf32> -> vector<8x8xf32>
    %111 = vector.extract_strided_slice %88 {offsets = [24, 0], sizes = [8, 32], strides = [1, 1]} : vector<32x32xf32> to vector<8x32xf32>
    %cst_45 = arith.constant dense<0.000000e+00> : vector<8x32xf32>
    %112 = tpu.matmul %110, %111, %cst_45 {dimension_numbers = #tpu.dot_dimension_numbers<[1], [0], [0], [1], [0, 0, 1, 1], [], []>} : vector<8x8xf32>, vector<8x32xf32>, vector<8x32xf32> -> vector<8x32xf32>
    %113 = arith.addf %107, %112 : vector<8x32xf32>
    %cst_46 = arith.constant 0.000000e+00 : f32
    %114 = vector.broadcast %cst_46 : f32 to vector<8x32xf32>
    %115 = vector.extract_strided_slice %87 {offsets = [32, 0], sizes = [8, 8], strides = [1, 1]} : vector<64x8xf32> to vector<8x8xf32>
    %116 = vector.extract_strided_slice %44 {offsets = [8, 0], sizes = [8, 8], strides = [1, 1]} : vector<16x32xf32> to vector<8x8xf32>
    %cst_47 = arith.constant dense<0.000000e+00> : vector<8x8xf32>
    %117 = tpu.matmul %115, %116, %cst_47 {dimension_numbers = #tpu.dot_dimension_numbers<[1], [0], [0], [1], [0, 0, 1, 1], [], []>} : vector<8x8xf32>, vector<8x8xf32>, vector<8x8xf32> -> vector<8x8xf32>
    %118 = vector.extract_strided_slice %88 {offsets = [0, 0], sizes = [8, 32], strides = [1, 1]} : vector<32x32xf32> to vector<8x32xf32>
    %cst_48 = arith.constant dense<0.000000e+00> : vector<8x32xf32>
    %119 = tpu.matmul %117, %118, %cst_48 {dimension_numbers = #tpu.dot_dimension_numbers<[1], [0], [0], [1], [0, 0, 1, 1], [], []>} : vector<8x8xf32>, vector<8x32xf32>, vector<8x32xf32> -> vector<8x32xf32>
    %120 = arith.addf %114, %119 : vector<8x32xf32>
    %121 = vector.extract_strided_slice %87 {offsets = [40, 0], sizes = [8, 8], strides = [1, 1]} : vector<64x8xf32> to vector<8x8xf32>
    %122 = vector.extract_strided_slice %44 {offsets = [8, 8], sizes = [8, 8], strides = [1, 1]} : vector<16x32xf32> to vector<8x8xf32>
    %cst_49 = arith.constant dense<0.000000e+00> : vector<8x8xf32>
    %123 = tpu.matmul %121, %122, %cst_49 {dimension_numbers = #tpu.dot_dimension_numbers<[1], [0], [0], [1], [0, 0, 1, 1], [], []>} : vector<8x8xf32>, vector<8x8xf32>, vector<8x8xf32> -> vector<8x8xf32>
    %124 = vector.extract_strided_slice %88 {offsets = [8, 0], sizes = [8, 32], strides = [1, 1]} : vector<32x32xf32> to vector<8x32xf32>
    %cst_50 = arith.constant dense<0.000000e+00> : vector<8x32xf32>
    %125 = tpu.matmul %123, %124, %cst_50 {dimension_numbers = #tpu.dot_dimension_numbers<[1], [0], [0], [1], [0, 0, 1, 1], [], []>} : vector<8x8xf32>, vector<8x32xf32>, vector<8x32xf32> -> vector<8x32xf32>
    %126 = arith.addf %120, %125 : vector<8x32xf32>
    %127 = vector.extract_strided_slice %87 {offsets = [48, 0], sizes = [8, 8], strides = [1, 1]} : vector<64x8xf32> to vector<8x8xf32>
    %128 = vector.extract_strided_slice %44 {offsets = [8, 16], sizes = [8, 8], strides = [1, 1]} : vector<16x32xf32> to vector<8x8xf32>
    %cst_51 = arith.constant dense<0.000000e+00> : vector<8x8xf32>
    %129 = tpu.matmul %127, %128, %cst_51 {dimension_numbers = #tpu.dot_dimension_numbers<[1], [0], [0], [1], [0, 0, 1, 1], [], []>} : vector<8x8xf32>, vector<8x8xf32>, vector<8x8xf32> -> vector<8x8xf32>
    %130 = vector.extract_strided_slice %88 {offsets = [16, 0], sizes = [8, 32], strides = [1, 1]} : vector<32x32xf32> to vector<8x32xf32>
    %cst_52 = arith.constant dense<0.000000e+00> : vector<8x32xf32>
    %131 = tpu.matmul %129, %130, %cst_52 {dimension_numbers = #tpu.dot_dimension_numbers<[1], [0], [0], [1], [0, 0, 1, 1], [], []>} : vector<8x8xf32>, vector<8x32xf32>, vector<8x32xf32> -> vector<8x32xf32>
    %132 = arith.addf %126, %131 : vector<8x32xf32>
    %133 = vector.extract_strided_slice %87 {offsets = [56, 0], sizes = [8, 8], strides = [1, 1]} : vector<64x8xf32> to vector<8x8xf32>
    %134 = vector.extract_strided_slice %44 {offsets = [8, 24], sizes = [8, 8], strides = [1, 1]} : vector<16x32xf32> to vector<8x8xf32>
    %cst_53 = arith.constant dense<0.000000e+00> : vector<8x8xf32>
    %135 = tpu.matmul %133, %134, %cst_53 {dimension_numbers = #tpu.dot_dimension_numbers<[1], [0], [0], [1], [0, 0, 1, 1], [], []>} : vector<8x8xf32>, vector<8x8xf32>, vector<8x8xf32> -> vector<8x8xf32>
    %136 = vector.extract_strided_slice %88 {offsets = [24, 0], sizes = [8, 32], strides = [1, 1]} : vector<32x32xf32> to vector<8x32xf32>
    %cst_54 = arith.constant dense<0.000000e+00> : vector<8x32xf32>
    %137 = tpu.matmul %135, %136, %cst_54 {dimension_numbers = #tpu.dot_dimension_numbers<[1], [0], [0], [1], [0, 0, 1, 1], [], []>} : vector<8x8xf32>, vector<8x32xf32>, vector<8x32xf32> -> vector<8x32xf32>
    %138 = arith.addf %132, %137 : vector<8x32xf32>
    %139 = tpu.concatenate %113, %138 in 0 : vector<8x32xf32>, vector<8x32xf32> -> vector<16x32xf32>
    %c0_55 = arith.constant 0 : index
    %c0_56 = arith.constant 0 : index
    %140 = vector.load %arg10[%c0_55, %c0_56] : memref<1x32xf32, #tpu.memory_space<vmem>>, vector<1x32xf32>
    %141 = vector.broadcast %140 : vector<1x32xf32> to vector<16x32xf32>
    %142 = arith.addf %139, %141 : vector<16x32xf32>
    %143 = arith.addf %5, %142 : vector<16x32xf32>
    %c0_57 = arith.constant 0 : index
    %c0_58 = arith.constant 0 : index
    %144 = vector.load %arg11[%c0_57, %c0_58] : memref<1x32xf32, #tpu.memory_space<vmem>>, vector<1x32xf32>
    %c0_59 = arith.constant 0 : index
    %c0_60 = arith.constant 0 : index
    %145 = vector.load %arg12[%c0_59, %c0_60] : memref<1x32xf32, #tpu.memory_space<vmem>>, vector<1x32xf32>
    %cst_61 = arith.constant dense<0.000000e+00> : vector<16xf32>
    %146 = vector.multi_reduction <add>, %143, %cst_61 [1] : vector<16x32xf32> to vector<16xf32>
    %147 = vector.shape_cast %146 : vector<16xf32> to vector<16x1xf32>
    %cst_62 = arith.constant 3.200000e+01 : f32
    %148 = vector.broadcast %cst_62 : f32 to vector<16x1xf32>
    %149 = arith.divf %147, %148 : vector<16x1xf32>
    %150 = vector.broadcast %149 : vector<16x1xf32> to vector<16x32xf32>
    %151 = arith.subf %143, %150 : vector<16x32xf32>
    %152 = arith.mulf %151, %151 : vector<16x32xf32>
    %cst_63 = arith.constant dense<0.000000e+00> : vector<16xf32>
    %153 = vector.multi_reduction <add>, %152, %cst_63 [1] : vector<16x32xf32> to vector<16xf32>
    %154 = vector.shape_cast %153 : vector<16xf32> to vector<16x1xf32>
    %cst_64 = arith.constant 3.200000e+01 : f32
    %155 = vector.broadcast %cst_64 : f32 to vector<16x1xf32>
    %156 = arith.divf %154, %155 : vector<16x1xf32>
    %157 = vector.broadcast %149 : vector<16x1xf32> to vector<16x32xf32>
    %158 = arith.subf %143, %157 : vector<16x32xf32>
    %cst_65 = arith.constant 9.99999974E-6 : f32
    %159 = vector.broadcast %cst_65 : f32 to vector<16x1xf32>
    %160 = arith.addf %156, %159 : vector<16x1xf32>
    %161 = math.rsqrt %160 : vector<16x1xf32>
    %162 = vector.broadcast %161 : vector<16x1xf32> to vector<16x32xf32>
    %163 = arith.mulf %158, %162 : vector<16x32xf32>
    %164 = vector.broadcast %144 : vector<1x32xf32> to vector<16x32xf32>
    %165 = arith.mulf %163, %164 : vector<16x32xf32>
    %166 = vector.broadcast %145 : vector<1x32xf32> to vector<16x32xf32>
    %167 = arith.addf %165, %166 : vector<16x32xf32>
    %c0_66 = arith.constant 0 : index
    %c0_67 = arith.constant 0 : index
    %168 = vector.load %arg13[%c0_66, %c0_67] : memref<32x128xf32, #tpu.memory_space<vmem>>, vector<32x128xf32>
    %cst_68 = arith.constant dense<0.000000e+00> : vector<16x128xf32>
    %169 = tpu.matmul %167, %168, %cst_68 {dimension_numbers = #tpu.dot_dimension_numbers<[1], [0], [0], [1], [0, 0, 1, 1], [], []>} : vector<16x32xf32>, vector<32x128xf32>, vector<16x128xf32> -> vector<16x128xf32>
    %c0_69 = arith.constant 0 : index
    %c0_70 = arith.constant 0 : index
    %170 = vector.load %arg14[%c0_69, %c0_70] : memref<1x128xf32, #tpu.memory_space<vmem>>, vector<1x128xf32>
    %171 = vector.broadcast %170 : vector<1x128xf32> to vector<16x128xf32>
    %172 = arith.addf %169, %171 : vector<16x128xf32>
    %cst_71 = arith.constant 5.000000e-01 : f32
    %173 = vector.broadcast %cst_71 : f32 to vector<16x128xf32>
    %174 = arith.mulf %173, %172 : vector<16x128xf32>
    %cst_72 = arith.constant 2.000000e+00 : f32
    %175 = math.sqrt %cst_72 : f32
    %176 = vector.broadcast %175 : f32 to vector<16x128xf32>
    %177 = arith.divf %172, %176 : vector<16x128xf32>
    %178 = math.erf %177 : vector<16x128xf32>
    %cst_73 = arith.constant 1.000000e+00 : f32
    %179 = vector.broadcast %cst_73 : f32 to vector<16x128xf32>
    %180 = arith.addf %179, %178 : vector<16x128xf32>
    %181 = arith.mulf %174, %180 : vector<16x128xf32>
    %c0_74 = arith.constant 0 : index
    %c0_75 = arith.constant 0 : index
    %182 = vector.load %arg15[%c0_74, %c0_75] : memref<128x32xf32, #tpu.memory_space<vmem>>, vector<128x32xf32>
    %cst_76 = arith.constant dense<0.000000e+00> : vector<16x32xf32>
    %183 = tpu.matmul %181, %182, %cst_76 {dimension_numbers = #tpu.dot_dimension_numbers<[1], [0], [0], [1], [0, 0, 1, 1], [], []>} : vector<16x128xf32>, vector<128x32xf32>, vector<16x32xf32> -> vector<16x32xf32>
    %c0_77 = arith.constant 0 : index
    %c0_78 = arith.constant 0 : index
    %184 = vector.load %arg16[%c0_77, %c0_78] : memref<1x32xf32, #tpu.memory_space<vmem>>, vector<1x32xf32>
    %185 = vector.broadcast %184 : vector<1x32xf32> to vector<16x32xf32>
    %186 = arith.addf %183, %185 : vector<16x32xf32>
    %187 = arith.addf %143, %186 : vector<16x32xf32>
    %188 = vector.extract_strided_slice %187 {offsets = [0, 0], sizes = [8, 32], strides = [1, 1]} : vector<16x32xf32> to vector<8x32xf32>
    %189 = vector.extract_strided_slice %187 {offsets = [8, 0], sizes = [8, 32], strides = [1, 1]} : vector<16x32xf32> to vector<8x32xf32>
    %190 = vector.shape_cast %188 : vector<8x32xf32> to vector<8x1x32xf32>
    %191 = vector.shape_cast %189 : vector<8x32xf32> to vector<8x1x32xf32>
    %192 = tpu.concatenate %190, %191 in 1 : vector<8x1x32xf32>, vector<8x1x32xf32> -> vector<8x2x32xf32>
    %c0_79 = arith.constant 0 : index
    %c0_80 = arith.constant 0 : index
    %c0_81 = arith.constant 0 : index
    %193 = vector.load %arg17[%c0_79, %c0_80, %c0_81] : memref<8x2x32xf32, #tpu.memory_space<vmem>>, vector<8x2x32xf32>
    tpu.vector_store %arg17[%c0_79, %c0_80, %c0_81], %192 {strides = array<i32>} : memref<8x2x32xf32, #tpu.memory_space<vmem>>, vector<8x2x32xf32>,
    return
  }
}

</mosaic_0001>

<llo_original>
// kernel: residual_attention_block.1
$region0: #{residual_attention_block.1}
  #allocation0 [shape = 'u32[]', space=smem, size = 0x4, offset = 0x4, fixed_abs, tag = 'smem constant byte address 0x4 - core index']
  #allocation1 [shape = 'u32[72,128]{1,0:T(1,128)}', space=vmem, size = 0x9000, scoped, tag = 'internal scratch']
  %s0 = inlined_call_operand.hbm [shape: f32[8,2,32], index: 0, kind: input, shape index: {}]
  %s1 = inlined_call_operand.vmem [shape: f32[1,32], index: 1, kind: input, shape index: {}]
  %s2 = inlined_call_operand.vmem [shape: f32[1,32], index: 2, kind: input, shape index: {}]
  %s3 = inlined_call_operand.vmem [shape: f32[32,32], index: 3, kind: input, shape index: {}]
  %s4 = inlined_call_operand.vmem [shape: f32[1,32], index: 4, kind: input, shape index: {}]
  %s5 = inlined_call_operand.vmem [shape: f32[32,32], index: 5, kind: input, shape index: {}]
  %s6 = inlined_call_operand.hbm [shape: f32[1,32], index: 6, kind: input, shape index: {}]
  %s7 = inlined_call_operand.vmem [shape: f32[32,32], index: 7, kind: input, shape index: {}]
  %s8 = inlined_call_operand.vmem [shape: f32[1,32], index: 8, kind: input, shape index: {}]
  %s9 = inlined_call_operand.vmem [shape: f32[32,32], index: 9, kind: input, shape index: {}]
  %s10 = inlined_call_operand.hbm [shape: f32[1,32], index: 10, kind: input, shape index: {}]
  %s11 = inlined_call_operand.vmem [shape: f32[1,32], index: 11, kind: input, shape index: {}]
  %s12 = inlined_call_operand.vmem [shape: f32[1,32], index: 12, kind: input, shape index: {}]
  %s13 = inlined_call_operand.vmem [shape: f32[32,128], index: 13, kind: input, shape index: {}]
  %s14 = inlined_call_operand.hbm [shape: f32[1,128], index: 14, kind: input, shape index: {}]
  %s15 = inlined_call_operand.vmem [shape: f32[128,32], index: 15, kind: input, shape index: {}]
  %s16 = inlined_call_operand.hbm [shape: f32[1,32], index: 16, kind: input, shape index: {}]
  %s17 = inlined_call_operand.hbm [shape: f32[8,2,32], index: 17, kind: output, shape index: {}]
  %s18 = sld [smem:[#allocation0]]
  $region98: #{residual_attention_block.1} parent=0
    _
  %s20 = ssub.s32 1, %s18
  %s21 = scalar_select 0, %s20, %s18
  $region1: #{residual_attention_block.1} parent=0
    #allocation2 [shape = 'u8[8192]{0}', space=vmem, size = 0x2000, scoped, tag = 'input window, operand 0, single buffered']
    #allocation3 [shape = 's32[1]{0}', space=sflag, size = 0x4, scoped, tag = 'scoped memory for residual_attention_block.1']
    #allocation4 [shape = 's32[1]{0}', space=sflag, size = 0x4, scoped, tag = 'scoped memory for residual_attention_block.1']
    #allocation5 [shape = 'u8[512]{0}', space=vmem, size = 0x400, scoped, tag = 'input window, operand 6, single buffered']
    #allocation6 [shape = 's32[1]{0}', space=sflag, size = 0x4, scoped, tag = 'scoped memory for residual_attention_block.1']
    #allocation7 [shape = 'u8[512]{0}', space=vmem, size = 0x400, scoped, tag = 'input window, operand 10, single buffered']
    #allocation8 [shape = 'u8[512]{0}', space=vmem, size = 0x400, scoped, tag = 'input window, operand 14, single buffered']
    #allocation9 [shape = 's32[1]{0}', space=sflag, size = 0x4, scoped, tag = 'scoped memory for residual_attention_block.1']
    #allocation10 [shape = 'u8[512]{0}', space=vmem, size = 0x400, scoped, tag = 'input window, operand 16, single buffered']
    #allocation11 [shape = 'u8[8192]{0}', space=vmem, size = 0x2000, scoped, tag = 'output window, operand 0, single buffered']
    %22 = vsyncpa [#allocation3], 0
    %23 = vsyncpa [#allocation6], 0
    %24 = vsyncpa [#allocation9], 0
    %25 = vsyncpa [#allocation4], 0
    // Predicated region
    $region2: #{residual_attention_block.1} parent=1 // pred_check
      _
    $region3: #{residual_attention_block.1} parent=1 // pred_check_branch
      %27 = sbr.rel (0) target = $region5
    $region4: #{residual_attention_block.1} parent=1 // pred_region
      %29 = vsyncadd [#allocation3], 0
      %s30 = sshll.u32 %s0, 4
      %s31 = int_to_ptr.hbm [resolvable:$true] %s30
      %s32 = sshll.u32 [#allocation2], 4
      %s33 = int_to_ptr.vmem [resolvable:$true] %s32
      %38 = dma.hbm_to_vmem [thread:$0]  %s31, 256, %s33, [#allocation3], 32, 32, 2
    $region5: #{residual_attention_block.1} parent=1 // pred_fallthru
      _
    // Predicated region
    $region6: #{residual_attention_block.1} parent=1 // pred_check
      _
    $region7: #{residual_attention_block.1} parent=1 // pred_check_branch
      %40 = sbr.rel (0) target = $region9
    $region8: #{residual_attention_block.1} parent=1 // pred_region
      _
    $region9: #{residual_attention_block.1} parent=1 // pred_fallthru
      _
    // Predicated region
    $region10: #{residual_attention_block.1} parent=1 // pred_check
      _
    $region11: #{residual_attention_block.1} parent=1 // pred_check_branch
      %42 = sbr.rel (0) target = $region13
    $region12: #{residual_attention_block.1} parent=1 // pred_region
      _
    $region13: #{residual_attention_block.1} parent=1 // pred_fallthru
      _
    // Predicated region
    $region14: #{residual_attention_block.1} parent=1 // pred_check
      _
    $region15: #{residual_attention_block.1} parent=1 // pred_check_branch
      %44 = sbr.rel (0) target = $region17
    $region16: #{residual_attention_block.1} parent=1 // pred_region
      _
    $region17: #{residual_attention_block.1} parent=1 // pred_fallthru
      _
    // Predicated region
    $region18: #{residual_attention_block.1} parent=1 // pred_check
      _
    $region19: #{residual_attention_block.1} parent=1 // pred_check_branch
      %46 = sbr.rel (0) target = $region21
    $region20: #{residual_attention_block.1} parent=1 // pred_region
      _
    $region21: #{residual_attention_block.1} parent=1 // pred_fallthru
      _
    // Predicated region
    $region22: #{residual_attention_block.1} parent=1 // pred_check
      _
    $region23: #{residual_attention_block.1} parent=1 // pred_check_branch
      %48 = sbr.rel (0) target = $region25
    $region24: #{residual_attention_block.1} parent=1 // pred_region
      _
    $region25: #{residual_attention_block.1} parent=1 // pred_fallthru
      _
    // Predicated region
    $region26: #{residual_attention_block.1} parent=1 // pred_check
      _
    $region27: #{residual_attention_block.1} parent=1 // pred_check_branch
      %50 = sbr.rel (0) target = $region29
    $region28: #{residual_attention_block.1} parent=1 // pred_region
      %52 = vsyncadd [#allocation6], 0
      %s54 = sshll.u32 %s6, 4
      %s55 = int_to_ptr.hbm [resolvable:$true] %s54
      %s56 = sshll.u32 [#allocation5], 4
      %s57 = int_to_ptr.vmem [resolvable:$true] %s56
      %59 = dma.hbm_to_vmem [thread:$0]  %s55, 16, %s57, [#allocation6]
    $region29: #{residual_attention_block.1} parent=1 // pred_fallthru
      _
    // Predicated region
    $region30: #{residual_attention_block.1} parent=1 // pred_check
      _
    $region31: #{residual_attention_block.1} parent=1 // pred_check_branch
      %61 = sbr.rel (0) target = $region33
    $region32: #{residual_attention_block.1} parent=1 // pred_region
      _
    $region33: #{residual_attention_block.1} parent=1 // pred_fallthru
      _
    // Predicated region
    $region34: #{residual_attention_block.1} parent=1 // pred_check
      _
    $region35: #{residual_attention_block.1} parent=1 // pred_check_branch
      %63 = sbr.rel (0) target = $region37
    $region36: #{residual_attention_block.1} parent=1 // pred_region
      _
    $region37: #{residual_attention_block.1} parent=1 // pred_fallthru
      _
    // Predicated region
    $region38: #{residual_attention_block.1} parent=1 // pred_check
      _
    $region39: #{residual_attention_block.1} parent=1 // pred_check_branch
      %65 = sbr.rel (0) target = $region41
    $region40: #{residual_attention_block.1} parent=1 // pred_region
      _
    $region41: #{residual_attention_block.1} parent=1 // pred_fallthru
      _
    // Predicated region
    $region42: #{residual_attention_block.1} parent=1 // pred_check
      _
    $region43: #{residual_attention_block.1} parent=1 // pred_check_branch
      %67 = sbr.rel (0) target = $region45
    $region44: #{residual_attention_block.1} parent=1 // pred_region
      %69 = vsyncadd [#allocation6], 0
      %s71 = sshll.u32 %s10, 4
      %s72 = int_to_ptr.hbm [resolvable:$true] %s71
      %s73 = sshll.u32 [#allocation7], 4
      %s74 = int_to_ptr.vmem [resolvable:$true] %s73
      %76 = dma.hbm_to_vmem [thread:$0]  %s72, 16, %s74, [#allocation6]
    $region45: #{residual_attention_block.1} parent=1 // pred_fallthru
      _
    // Predicated region
    $region46: #{residual_attention_block.1} parent=1 // pred_check
      _
    $region47: #{residual_attention_block.1} parent=1 // pred_check_branch
      %78 = sbr.rel (0) target = $region49
    $region48: #{residual_attention_block.1} parent=1 // pred_region
      _
    $region49: #{residual_attention_block.1} parent=1 // pred_fallthru
      _
    // Predicated region
    $region50: #{residual_attention_block.1} parent=1 // pred_check
      _
    $region51: #{residual_attention_block.1} parent=1 // pred_check_branch
      %80 = sbr.rel (0) target = $region53
    $region52: #{residual_attention_block.1} parent=1 // pred_region
      _
    $region53: #{residual_attention_block.1} parent=1 // pred_fallthru
      _
    // Predicated region
    $region54: #{residual_attention_block.1} parent=1 // pred_check
      _
    $region55: #{residual_attention_block.1} parent=1 // pred_check_branch
      %82 = sbr.rel (0) target = $region57
    $region56: #{residual_attention_block.1} parent=1 // pred_region
      _
    $region57: #{residual_attention_block.1} parent=1 // pred_fallthru
      _
    // Predicated region
    $region58: #{residual_attention_block.1} parent=1 // pred_check
      _
    $region59: #{residual_attention_block.1} parent=1 // pred_check_branch
      %84 = sbr.rel (0) target = $region61
    $region60: #{residual_attention_block.1} parent=1 // pred_region
      %86 = vsyncadd [#allocation9], 0
      %s88 = sshll.u32 %s14, 4
      %s89 = int_to_ptr.hbm [resolvable:$true] %s88
      %s90 = sshll.u32 [#allocation8], 4
      %s91 = int_to_ptr.vmem [resolvable:$true] %s90
      %93 = dma.hbm_to_vmem [thread:$0]  %s89, 16, %s91, [#allocation9]
    $region61: #{residual_attention_block.1} parent=1 // pred_fallthru
      _
    // Predicated region
    $region62: #{residual_attention_block.1} parent=1 // pred_check
      _
    $region63: #{residual_attention_block.1} parent=1 // pred_check_branch
      %95 = sbr.rel (0) target = $region65
    $region64: #{residual_attention_block.1} parent=1 // pred_region
      _
    $region65: #{residual_attention_block.1} parent=1 // pred_fallthru
      _
    // Predicated region
    $region66: #{residual_attention_block.1} parent=1 // pred_check
      _
    $region67: #{residual_attention_block.1} parent=1 // pred_check_branch
      %97 = sbr.rel (0) target = $region69
    $region68: #{residual_attention_block.1} parent=1 // pred_region
      %99 = vsyncadd [#allocation9], 0
      %s101 = sshll.u32 %s16, 4
      %s102 = int_to_ptr.hbm [resolvable:$true] %s101
      %s103 = sshll.u32 [#allocation10], 4
      %s104 = int_to_ptr.vmem [resolvable:$true] %s103
      %106 = dma.hbm_to_vmem [thread:$0]  %s102, 16, %s104, [#allocation9]
    $region69: #{residual_attention_block.1} parent=1 // pred_fallthru
      _
    // Predicated region
    $region70: #{residual_attention_block.1} parent=1 // pred_check
      _
    $region71: #{residual_attention_block.1} parent=1 // pred_check_branch
      %108 = sbr.rel (0) target = $region73
    $region72: #{residual_attention_block.1} parent=1 // pred_region
      %110 = dma.done [#allocation3], 256
    $region73: #{residual_attention_block.1} parent=1 // pred_fallthru
      _
    // Predicated region
    $region74: #{residual_attention_block.1} parent=1 // pred_check
      _
    $region75: #{residual_attention_block.1} parent=1 // pred_check_branch
      %112 = sbr.rel (0) target = $region77
    $region76: #{residual_attention_block.1} parent=1 // pred_region
      %114 = dma.done [#allocation6], 16
    $region77: #{residual_attention_block.1} parent=1 // pred_fallthru
      _
    // Predicated region
    $region78: #{residual_attention_block.1} parent=1 // pred_check
      _
    $region79: #{residual_attention_block.1} parent=1 // pred_check_branch
      %116 = sbr.rel (0) target = $region81
    $region80: #{residual_attention_block.1} parent=1 // pred_region
      %118 = dma.done [#allocation6], 16
    $region81: #{residual_attention_block.1} parent=1 // pred_fallthru
      _
    // Predicated region
    $region82: #{residual_attention_block.1} parent=1 // pred_check
      _
    $region83: #{residual_attention_block.1} parent=1 // pred_check_branch
      %120 = sbr.rel (0) target = $region85
    $region84: #{residual_attention_block.1} parent=1 // pred_region
      %122 = dma.done [#allocation9], 16
    $region85: #{residual_attention_block.1} parent=1 // pred_fallthru
      _
    // Predicated region
    $region86: #{residual_attention_block.1} parent=1 // pred_check
      _
    $region87: #{residual_attention_block.1} parent=1 // pred_check_branch
      %124 = sbr.rel (0) target = $region89
    $region88: #{residual_attention_block.1} parent=1 // pred_region
      %126 = dma.done [#allocation9], 16
    $region89: #{residual_attention_block.1} parent=1 // pred_fallthru
      _
    %v127 = vld [vmem:[#allocation2] sm:$0x3]
    %v128 = vld [vmem:[#allocation2 + $0x2] sm:$0x3]
    %v129 = vld [vmem:[#allocation2 + $0x4] sm:$0x3]
    %v130 = vld [vmem:[#allocation2 + $0x6] sm:$0x3]
    %v131 = vld [vmem:[#allocation2 + $0x8] sm:$0x3]
    %v132 = vld [vmem:[#allocation2 + $0xa] sm:$0x3]
    %v133 = vld [vmem:[#allocation2 + $0xc] sm:$0x3]
    %v134 = vld [vmem:[#allocation2 + $0xe] sm:$0x3]
    %v143 = vrot.slane %v128, 7
    %vm144 = vcmask 1041409
    %v145 = vsel %vm144, %v143, %v127
    %v146 = vrot.slane %v129, 6
    %vm147 = vcmask 1042434
    %v148 = vsel %vm147, %v146, %v145
    %v149 = vrot.slane %v130, 5
    %vm150 = vcmask 1043459
    %v151 = vsel %vm150, %v149, %v148
    %v152 = vrot.slane %v131, 4
    %vm153 = vcmask 1044484
    %v154 = vsel %vm153, %v152, %v151
    %v155 = vrot.slane %v132, 3
    %vm156 = vcmask 1045509
    %v157 = vsel %vm156, %v155, %v154
    %v158 = vrot.slane %v133, 2
    %vm159 = vcmask 1046534
    %v160 = vsel %vm159, %v158, %v157
    %v161 = vrot.slane %v134, 1
    %vm162 = vcmask 1047559
    %v163 = vsel %vm162, %v161, %v160
    %v165 = vrot.slane %v127, 1
    %v166 = vsel %vm144, %v128, %v165
    %v167 = vrot.slane %v129, 7
    %v168 = vsel %vm147, %v167, %v166
    %v169 = vrot.slane %v130, 6
    %v170 = vsel %vm150, %v169, %v168
    %v171 = vrot.slane %v131, 5
    %v172 = vsel %vm153, %v171, %v170
    %v173 = vrot.slane %v132, 4
    %v174 = vsel %vm156, %v173, %v172
    %v175 = vrot.slane %v133, 3
    %v176 = vsel %vm159, %v175, %v174
    %v177 = vrot.slane %v134, 2
    %v178 = vsel %vm162, %v177, %v176
    %v180 = vld [vmem:[%s1] sm:$0x1]
    %v181 = vld [vmem:[%s2] sm:$0x1]
    %vm182 = vcmask 261120
    %v183 = vsel %vm182, %v163, 0.0
    %184 = vadd.xlane.f32.xlu0 %v183
    %v185 = vpop.xlane.xlu0 %184
    %v186 = vsel %vm182, %v178, 0.0
    %187 = vadd.xlane.f32.xlu0 %v186
    %v188 = vpop.xlane.xlu0 %187
    %v189 = vrcp.pop 32.0
    %v190 = vmul.f32 32.0, %v189
    %v191 = vsub.f32 1.0, %v190
    %v192 = vmul.f32 %v189, %v191
    %v193 = vadd.f32 %v189, %v192
    %vm194 = vweird.f32 %v189
    %v195 = vsel %vm194, %v189, %v193
    %v196 = vmul.f32 %v185, %v195
    %v197 = vmul.f32 %v188, %v195
    %v198 = vsub.f32 %v163, %v196
    %v199 = vsub.f32 %v178, %v197
    %v200 = vmul.f32 %v198, %v198
    %v201 = vmul.f32 %v199, %v199
    %v202 = vsel %vm182, %v200, 0.0
    %203 = vadd.xlane.f32.xlu0 %v202
    %v204 = vpop.xlane.xlu0 %203
    %v205 = vsel %vm182, %v201, 0.0
    %206 = vadd.xlane.f32.xlu0 %v205
    %v207 = vpop.xlane.xlu0 %206
    %v208 = vmul.f32 %v204, %v195
    %v209 = vmul.f32 %v207, %v195
    %v210 = vadd.f32 %v208, 1e-05
    %v211 = vadd.f32 %v209, 1e-05
    %v212 = vrsqrt.pop %v210
    %v213 = vmul.f32 %v212, %v210
    %v214 = vmul.f32 %v213, %v212
    %v215 = vmul.f32 0.5, %v214
    %v216 = vsub.f32 1.5, %v215
    %v217 = vmul.f32 %v212, %v216
    %vm218 = vweird.f32 %v210
    %vm219 = vweird.f32 %v212
    %vm220 = vmor %vm218, %vm219
    %v221 = vsel %vm220, %v212, %v217
    %v222 = vrsqrt.pop %v211
    %v223 = vmul.f32 %v222, %v211
    %v224 = vmul.f32 %v223, %v222
    %v225 = vmul.f32 0.5, %v224
    %v226 = vsub.f32 1.5, %v225
    %v227 = vmul.f32 %v222, %v226
    %vm228 = vweird.f32 %v211
    %vm229 = vweird.f32 %v222
    %vm230 = vmor %vm228, %vm229
    %v231 = vsel %vm230, %v222, %v227
    %v232 = vmul.f32 %v198, %v221
    %v233 = vmul.f32 %v199, %v231
    %v235 = vperm.slane %v180, 0
    %v237 = vmul.f32 %v232, %v235
    %v238 = vmul.f32 %v233, %v235
    %v240 = vperm.slane %v181, 0
    %v242 = vadd.f32 %v237, %v240
    %v243 = vadd.f32 %v238, %v240
    %v244 = vld [vmem:[%s3] sm:$0xff]
    %v245 = vld [vmem:[%s3 + $0x8] sm:$0xff]
    %v246 = vld [vmem:[%s3 + $0x10] sm:$0xff]
    %v247 = vld [vmem:[%s3 + $0x18] sm:$0xff]
    %v248 = vld [vmem:[%s4] sm:$0x1]
    %v250 = vperm.slane %v248, 0
    %v253 = vsel %vm182, %v242, 0
    %v256 = vsel %vm182, %v243, 0
    %258 = vmatpush.msra.mxu0 0.0
    %259 = vmatpush.msra.mxu0 0.0
    %260 = vmatpush.msra.mxu0 0.0
    %261 = vmatpush.msra.mxu0 0.0
    %262 = vmatpush.msra.mxu0 0.0
    %263 = vmatpush.msra.mxu0 0.0
    %264 = vmatpush.msra.mxu0 0.0
    %265 = vmatpush.msra.mxu0 0.0
    %266 = vmatpush.msra.mxu0 0.0
    %267 = vmatpush.msra.mxu0 0.0
    %268 = vmatpush.msra.mxu0 0.0
    %269 = vmatpush.msra.mxu0 0.0
    %270 = vmatpush.msra.mxu0 %v247
    %271 = vmatpush.msra.mxu0 %v246
    %272 = vmatpush.msra.mxu0 %v245
    %273 = vmatpush.msra.mxu0 %v244
    %274 = vmatmul.f32.gmra.mxu0 %v253
    %v275 = vpop.f32.mrf.mxu0
    %v276 = vadd.f32 %v250, %v275
    %277 = vmatmul.f32.gmra.mxu0 %v256
    %v278 = vpop.f32.mrf.mxu0
    %v279 = vadd.f32 %v250, %v278
    %280 = vdwg.mxu0
    %v281 = vld [vmem:[%s5] sm:$0xff]
    %v282 = vld [vmem:[%s5 + $0x8] sm:$0xff]
    %v283 = vld [vmem:[%s5 + $0x10] sm:$0xff]
    %v284 = vld [vmem:[%s5 + $0x18] sm:$0xff]
    %v285 = vld [vmem:[#allocation5] sm:$0x1]
    %v287 = vperm.slane %v285, 0
    %289 = vmatpush.msra.mxu0 0.0
    %290 = vmatpush.msra.mxu0 0.0
    %291 = vmatpush.msra.mxu0 0.0
    %292 = vmatpush.msra.mxu0 0.0
    %293 = vmatpush.msra.mxu0 0.0
    %294 = vmatpush.msra.mxu0 0.0
    %295 = vmatpush.msra.mxu0 0.0
    %296 = vmatpush.msra.mxu0 0.0
    %297 = vmatpush.msra.mxu0 0.0
    %298 = vmatpush.msra.mxu0 0.0
    %299 = vmatpush.msra.mxu0 0.0
    %300 = vmatpush.msra.mxu0 0.0
    %301 = vmatpush.msra.mxu0 %v284
    %302 = vmatpush.msra.mxu0 %v283
    %303 = vmatpush.msra.mxu0 %v282
    %304 = vmatpush.msra.mxu0 %v281
    %305 = vmatmul.f32.gmra.mxu0 %v253
    %v306 = vpop.f32.mrf.mxu0
    %v307 = vadd.f32 %v287, %v306
    %308 = vmatmul.f32.gmra.mxu0 %v256
    %v309 = vpop.f32.mrf.mxu0
    %v310 = vadd.f32 %v287, %v309
    %311 = vdwg.mxu0
    %v312 = vld [vmem:[%s7] sm:$0xff]
    %v313 = vld [vmem:[%s7 + $0x8] sm:$0xff]
    %v314 = vld [vmem:[%s7 + $0x10] sm:$0xff]
    %v315 = vld [vmem:[%s7 + $0x18] sm:$0xff]
    %v316 = vld [vmem:[%s8] sm:$0x1]
    %v318 = vperm.slane %v316, 0
    %320 = vmatpush.msra.mxu0 0.0
    %321 = vmatpush.msra.mxu0 0.0
    %322 = vmatpush.msra.mxu0 0.0
    %323 = vmatpush.msra.mxu0 0.0
    %324 = vmatpush.msra.mxu0 0.0
    %325 = vmatpush.msra.mxu0 0.0
    %326 = vmatpush.msra.mxu0 0.0
    %327 = vmatpush.msra.mxu0 0.0
    %328 = vmatpush.msra.mxu0 0.0
    %329 = vmatpush.msra.mxu0 0.0
    %330 = vmatpush.msra.mxu0 0.0
    %331 = vmatpush.msra.mxu0 0.0
    %332 = vmatpush.msra.mxu0 %v315
    %333 = vmatpush.msra.mxu0 %v314
    %334 = vmatpush.msra.mxu0 %v313
    %335 = vmatpush.msra.mxu0 %v312
    %336 = vmatmul.f32.gmra.mxu0 %v253
    %v337 = vpop.f32.mrf.mxu0
    %v338 = vadd.f32 %v318, %v337
    %339 = vmatmul.f32.gmra.mxu0 %v256
    %v340 = vpop.f32.mrf.mxu0
    %v341 = vadd.f32 %v318, %v340
    %342 = vdwg.mxu0
    %vm343 = vcmask 64512
    %v345 = vsel %vm343, %v276, 0
    %v348 = vsel %vm343, %v307, 0
    %350 = vmatpush.xpose.msra.mxu0 0.0
    %351 = vmatpush.xpose.msra.mxu0 0.0
    %352 = vmatpush.xpose.msra.mxu0 0.0
    %353 = vmatpush.xpose.msra.mxu0 0.0
    %354 = vmatpush.xpose.msra.mxu0 0.0
    %355 = vmatpush.xpose.msra.mxu0 0.0
    %356 = vmatpush.xpose.msra.mxu0 0.0
    %357 = vmatpush.xpose.msra.mxu0 0.0
    %358 = vmatpush.xpose.msra.mxu0 0.0
    %359 = vmatpush.xpose.msra.mxu0 0.0
    %360 = vmatpush.xpose.msra.mxu0 0.0
    %361 = vmatpush.xpose.msra.mxu0 0.0
    %362 = vmatpush.xpose.msra.mxu0 0.0
    %363 = vmatpush.xpose.msra.mxu0 0.0
    %364 = vmatpush.xpose.msra.mxu0 0.0
    %365 = vmatpush.xpose.msra.mxu0 %v348
    %366 = vmatmul.f32.gmra.mxu0 %v345
    %v367 = vpop.f32.mrf.mxu0
    %v368 = vadd.f32 0.0, %v367
    %369 = vdwg.mxu0
    %370 = vrot.lane.b32.xlu0 %v276, 120
    %v371 = vpop.permute.xlu0 %370
    %372 = vrot.lane.b32.xlu0 %v307, 120
    %v373 = vpop.permute.xlu0 %372
    %v374 = vsel %vm343, %v371, 0
    %v376 = vsel %vm343, %v373, 0
    %378 = vmatpush.xpose.msra.mxu0 0.0
    %379 = vmatpush.xpose.msra.mxu0 0.0
    %380 = vmatpush.xpose.msra.mxu0 0.0
    %381 = vmatpush.xpose.msra.mxu0 0.0
    %382 = vmatpush.xpose.msra.mxu0 0.0
    %383 = vmatpush.xpose.msra.mxu0 0.0
    %384 = vmatpush.xpose.msra.mxu0 0.0
    %385 = vmatpush.xpose.msra.mxu0 0.0
    %386 = vmatpush.xpose.msra.mxu0 0.0
    %387 = vmatpush.xpose.msra.mxu0 0.0
    %388 = vmatpush.xpose.msra.mxu0 0.0
    %389 = vmatpush.xpose.msra.mxu0 0.0
    %390 = vmatpush.xpose.msra.mxu0 0.0
    %391 = vmatpush.xpose.msra.mxu0 0.0
    %392 = vmatpush.xpose.msra.mxu0 0.0
    %393 = vmatpush.xpose.msra.mxu0 %v376
    %394 = vmatmul.f32.gmra.mxu0 %v374
    %v395 = vpop.f32.mrf.mxu0
    %v396 = vadd.f32 0.0, %v395
    %397 = vdwg.mxu0
    %398 = vrot.lane.b32.xlu0 %v276, 112
    %v399 = vpop.permute.xlu0 %398
    %400 = vrot.lane.b32.xlu0 %v307, 112
    %v401 = vpop.permute.xlu0 %400
    %v402 = vsel %vm343, %v399, 0
    %v404 = vsel %vm343, %v401, 0
    %406 = vmatpush.xpose.msra.mxu0 0.0
    %407 = vmatpush.xpose.msra.mxu0 0.0
    %408 = vmatpush.xpose.msra.mxu0 0.0
    %409 = vmatpush.xpose.msra.mxu0 0.0
    %410 = vmatpush.xpose.msra.mxu0 0.0
    %411 = vmatpush.xpose.msra.mxu0 0.0
    %412 = vmatpush.xpose.msra.mxu0 0.0
    %413 = vmatpush.xpose.msra.mxu0 0.0
    %414 = vmatpush.xpose.msra.mxu0 0.0
    %415 = vmatpush.xpose.msra.mxu0 0.0
    %416 = vmatpush.xpose.msra.mxu0 0.0
    %417 = vmatpush.xpose.msra.mxu0 0.0
    %418 = vmatpush.xpose.msra.mxu0 0.0
    %419 = vmatpush.xpose.msra.mxu0 0.0
    %420 = vmatpush.xpose.msra.mxu0 0.0
    %421 = vmatpush.xpose.msra.mxu0 %v404
    %422 = vmatmul.f32.gmra.mxu0 %v402
    %v423 = vpop.f32.mrf.mxu0
    %v424 = vadd.f32 0.0, %v423
    %425 = vdwg.mxu0
    %426 = vrot.lane.b32.xlu0 %v276, 104
    %v427 = vpop.permute.xlu0 %426
    %428 = vrot.lane.b32.xlu0 %v307, 104
    %v429 = vpop.permute.xlu0 %428
    %v430 = vsel %vm343, %v427, 0
    %v432 = vsel %vm343, %v429, 0
    %434 = vmatpush.xpose.msra.mxu0 0.0
    %435 = vmatpush.xpose.msra.mxu0 0.0
    %436 = vmatpush.xpose.msra.mxu0 0.0
    %437 = vmatpush.xpose.msra.mxu0 0.0
    %438 = vmatpush.xpose.msra.mxu0 0.0
    %439 = vmatpush.xpose.msra.mxu0 0.0
    %440 = vmatpush.xpose.msra.mxu0 0.0
    %441 = vmatpush.xpose.msra.mxu0 0.0
    %442 = vmatpush.xpose.msra.mxu0 0.0
    %443 = vmatpush.xpose.msra.mxu0 0.0
    %444 = vmatpush.xpose.msra.mxu0 0.0
    %445 = vmatpush.xpose.msra.mxu0 0.0
    %446 = vmatpush.xpose.msra.mxu0 0.0
    %447 = vmatpush.xpose.msra.mxu0 0.0
    %448 = vmatpush.xpose.msra.mxu0 0.0
    %449 = vmatpush.xpose.msra.mxu0 %v432
    %450 = vmatmul.f32.gmra.mxu0 %v430
    %v451 = vpop.f32.mrf.mxu0
    %v452 = vadd.f32 0.0, %v451
    %453 = vdwg.mxu0
    %v455 = vsel %vm343, %v279, 0
    %v458 = vsel %vm343, %v310, 0
    %460 = vmatpush.xpose.msra.mxu0 0.0
    %461 = vmatpush.xpose.msra.mxu0 0.0
    %462 = vmatpush.xpose.msra.mxu0 0.0
    %463 = vmatpush.xpose.msra.mxu0 0.0
    %464 = vmatpush.xpose.msra.mxu0 0.0
    %465 = vmatpush.xpose.msra.mxu0 0.0
    %466 = vmatpush.xpose.msra.mxu0 0.0
    %467 = vmatpush.xpose.msra.mxu0 0.0
    %468 = vmatpush.xpose.msra.mxu0 0.0
    %469 = vmatpush.xpose.msra.mxu0 0.0
    %470 = vmatpush.xpose.msra.mxu0 0.0
    %471 = vmatpush.xpose.msra.mxu0 0.0
    %472 = vmatpush.xpose.msra.mxu0 0.0
    %473 = vmatpush.xpose.msra.mxu0 0.0
    %474 = vmatpush.xpose.msra.mxu0 0.0
    %475 = vmatpush.xpose.msra.mxu0 %v458
    %476 = vmatmul.f32.gmra.mxu0 %v455
    %v477 = vpop.f32.mrf.mxu0
    %v478 = vadd.f32 0.0, %v477
    %479 = vdwg.mxu0
    %480 = vrot.lane.b32.xlu0 %v279, 120
    %v481 = vpop.permute.xlu0 %480
    %482 = vrot.lane.b32.xlu0 %v310, 120
    %v483 = vpop.permute.xlu0 %482
    %v484 = vsel %vm343, %v481, 0
    %v486 = vsel %vm343, %v483, 0
    %488 = vmatpush.xpose.msra.mxu0 0.0
    %489 = vmatpush.xpose.msra.mxu0 0.0
    %490 = vmatpush.xpose.msra.mxu0 0.0
    %491 = vmatpush.xpose.msra.mxu0 0.0
    %492 = vmatpush.xpose.msra.mxu0 0.0
    %493 = vmatpush.xpose.msra.mxu0 0.0
    %494 = vmatpush.xpose.msra.mxu0 0.0
    %495 = vmatpush.xpose.msra.mxu0 0.0
    %496 = vmatpush.xpose.msra.mxu0 0.0
    %497 = vmatpush.xpose.msra.mxu0 0.0
    %498 = vmatpush.xpose.msra.mxu0 0.0
    %499 = vmatpush.xpose.msra.mxu0 0.0
    %500 = vmatpush.xpose.msra.mxu0 0.0
    %501 = vmatpush.xpose.msra.mxu0 0.0
    %502 = vmatpush.xpose.msra.mxu0 0.0
    %503 = vmatpush.xpose.msra.mxu0 %v486
    %504 = vmatmul.f32.gmra.mxu0 %v484
    %v505 = vpop.f32.mrf.mxu0
    %v506 = vadd.f32 0.0, %v505
    %507 = vdwg.mxu0
    %508 = vrot.lane.b32.xlu0 %v279, 112
    %v509 = vpop.permute.xlu0 %508
    %510 = vrot.lane.b32.xlu0 %v310, 112
    %v511 = vpop.permute.xlu0 %510
    %v512 = vsel %vm343, %v509, 0
    %v514 = vsel %vm343, %v511, 0
    %516 = vmatpush.xpose.msra.mxu0 0.0
    %517 = vmatpush.xpose.msra.mxu0 0.0
    %518 = vmatpush.xpose.msra.mxu0 0.0
    %519 = vmatpush.xpose.msra.mxu0 0.0
    %520 = vmatpush.xpose.msra.mxu0 0.0
    %521 = vmatpush.xpose.msra.mxu0 0.0
    %522 = vmatpush.xpose.msra.mxu0 0.0
    %523 = vmatpush.xpose.msra.mxu0 0.0
    %524 = vmatpush.xpose.msra.mxu0 0.0
    %525 = vmatpush.xpose.msra.mxu0 0.0
    %526 = vmatpush.xpose.msra.mxu0 0.0
    %527 = vmatpush.xpose.msra.mxu0 0.0
    %528 = vmatpush.xpose.msra.mxu0 0.0
    %529 = vmatpush.xpose.msra.mxu0 0.0
    %530 = vmatpush.xpose.msra.mxu0 0.0
    %531 = vmatpush.xpose.msra.mxu0 %v514
    %532 = vmatmul.f32.gmra.mxu0 %v512
    %v533 = vpop.f32.mrf.mxu0
    %v534 = vadd.f32 0.0, %v533
    %535 = vdwg.mxu0
    %536 = vrot.lane.b32.xlu0 %v279, 104
    %v537 = vpop.permute.xlu0 %536
    %538 = vrot.lane.b32.xlu0 %v310, 104
    %v539 = vpop.permute.xlu0 %538
    %v540 = vsel %vm343, %v537, 0
    %v542 = vsel %vm343, %v539, 0
    %544 = vmatpush.xpose.msra.mxu0 0.0
    %545 = vmatpush.xpose.msra.mxu0 0.0
    %546 = vmatpush.xpose.msra.mxu0 0.0
    %547 = vmatpush.xpose.msra.mxu0 0.0
    %548 = vmatpush.xpose.msra.mxu0 0.0
    %549 = vmatpush.xpose.msra.mxu0 0.0
    %550 = vmatpush.xpose.msra.mxu0 0.0
    %551 = vmatpush.xpose.msra.mxu0 0.0
    %552 = vmatpush.xpose.msra.mxu0 0.0
    %553 = vmatpush.xpose.msra.mxu0 0.0
    %554 = vmatpush.xpose.msra.mxu0 0.0
    %555 = vmatpush.xpose.msra.mxu0 0.0
    %556 = vmatpush.xpose.msra.mxu0 0.0
    %557 = vmatpush.xpose.msra.mxu0 0.0
    %558 = vmatpush.xpose.msra.mxu0 0.0
    %559 = vmatpush.xpose.msra.mxu0 %v542
    %560 = vmatmul.f32.gmra.mxu0 %v540
    %v561 = vpop.f32.mrf.mxu0
    %v562 = vadd.f32 0.0, %v561
    %563 = vdwg.mxu0
    %v564 = vsel %vm343, %v368, -inf
    %565 = vmax.xlane.f32.xlu0 %v564
    %v566 = vpop.xlane.xlu0 %565
    %v567 = vsel %vm343, %v396, -inf
    %568 = vmax.xlane.f32.xlu0 %v567
    %v569 = vpop.xlane.xlu0 %568
    %v570 = vsel %vm343, %v424, -inf
    %571 = vmax.xlane.f32.xlu0 %v570
    %v572 = vpop.xlane.xlu0 %571
    %v573 = vsel %vm343, %v452, -inf
    %574 = vmax.xlane.f32.xlu0 %v573
    %v575 = vpop.xlane.xlu0 %574
    %v576 = vsel %vm343, %v478, -inf
    %577 = vmax.xlane.f32.xlu0 %v576
    %v578 = vpop.xlane.xlu0 %577
    %v579 = vsel %vm343, %v506, -inf
    %580 = vmax.xlane.f32.xlu0 %v579
    %v581 = vpop.xlane.xlu0 %580
    %v582 = vsel %vm343, %v534, -inf
    %583 = vmax.xlane.f32.xlu0 %v582
    %v584 = vpop.xlane.xlu0 %583
    %v585 = vsel %vm343, %v562, -inf
    %586 = vmax.xlane.f32.xlu0 %v585
    %v587 = vpop.xlane.xlu0 %586
    %v588 = vsub.f32 %v368, %v566
    %v589 = vsub.f32 %v396, %v569
    %v590 = vsub.f32 %v424, %v572
    %v591 = vsub.f32 %v452, %v575
    %v592 = vsub.f32 %v478, %v578
    %v593 = vsub.f32 %v506, %v581
    %v594 = vsub.f32 %v534, %v584
    %v595 = vsub.f32 %v562, %v587
    %v596 = vmul.f32 %v588, 1.442695
    %v597 = vpow.pop %v596
    %v598 = vmul.f32 %v589, 1.442695
    %v599 = vpow.pop %v598
    %v600 = vmul.f32 %v590, 1.442695
    %v601 = vpow.pop %v600
    %v602 = vmul.f32 %v591, 1.442695
    %v603 = vpow.pop %v602
    %v604 = vmul.f32 %v592, 1.442695
    %v605 = vpow.pop %v604
    %v606 = vmul.f32 %v593, 1.442695
    %v607 = vpow.pop %v606
    %v608 = vmul.f32 %v594, 1.442695
    %v609 = vpow.pop %v608
    %v610 = vmul.f32 %v595, 1.442695
    %v611 = vpow.pop %v610
    %v612 = vsel %vm343, %v597, 0.0
    %613 = vadd.xlane.f32.xlu0 %v612
    %v614 = vpop.xlane.xlu0 %613
    %v615 = vsel %vm343, %v599, 0.0
    %616 = vadd.xlane.f32.xlu0 %v615
    %v617 = vpop.xlane.xlu0 %616
    %v618 = vsel %vm343, %v601, 0.0
    %619 = vadd.xlane.f32.xlu0 %v618
    %v620 = vpop.xlane.xlu0 %619
    %v621 = vsel %vm343, %v603, 0.0
    %622 = vadd.xlane.f32.xlu0 %v621
    %v623 = vpop.xlane.xlu0 %622
    %v624 = vsel %vm343, %v605, 0.0
    %625 = vadd.xlane.f32.xlu0 %v624
    %v626 = vpop.xlane.xlu0 %625
    %v627 = vsel %vm343, %v607, 0.0
    %628 = vadd.xlane.f32.xlu0 %v627
    %v629 = vpop.xlane.xlu0 %628
    %v630 = vsel %vm343, %v609, 0.0
    %631 = vadd.xlane.f32.xlu0 %v630
    %v632 = vpop.xlane.xlu0 %631
    %v633 = vsel %vm343, %v611, 0.0
    %634 = vadd.xlane.f32.xlu0 %v633
    %v635 = vpop.xlane.xlu0 %634
    %v636 = vrcp.pop %v614
    %v637 = vrcp.pop %v617
    %v638 = vrcp.pop %v620
    %v639 = vrcp.pop %v623
    %v640 = vrcp.pop %v626
    %v641 = vrcp.pop %v629
    %v642 = vrcp.pop %v632
    %v643 = vrcp.pop %v635
    %v644 = vmul.f32 %v597, %v636
    %v645 = vmul.f32 %v599, %v637
    %v646 = vmul.f32 %v601, %v638
    %v647 = vmul.f32 %v603, %v639
    %v648 = vmul.f32 %v605, %v640
    %v649 = vmul.f32 %v607, %v641
    %v650 = vmul.f32 %v609, %v642
    %v651 = vmul.f32 %v611, %v643
    %v652 = vld [vmem:[%s9] sm:$0xff]
    %v653 = vld [vmem:[%s9 + $0x8] sm:$0xff]
    %v654 = vld [vmem:[%s9 + $0x10] sm:$0xff]
    %v655 = vld [vmem:[%s9 + $0x18] sm:$0xff]
    %v657 = vsel %vm343, %v644, 0
    %659 = vmatpush.msra.mxu0 0.0
    %660 = vmatpush.msra.mxu0 0.0
    %661 = vmatpush.msra.mxu0 0.0
    %662 = vmatpush.msra.mxu0 0.0
    %663 = vmatpush.msra.mxu0 0.0
    %664 = vmatpush.msra.mxu0 0.0
    %665 = vmatpush.msra.mxu0 0.0
    %666 = vmatpush.msra.mxu0 0.0
    %667 = vmatpush.msra.mxu0 0.0
    %668 = vmatpush.msra.mxu0 0.0
    %669 = vmatpush.msra.mxu0 0.0
    %670 = vmatpush.msra.mxu0 0.0
    %671 = vmatpush.msra.mxu0 0.0
    %672 = vmatpush.msra.mxu0 0.0
    %673 = vmatpush.msra.mxu0 0.0
    %674 = vmatpush.msra.mxu0 %v338
    %675 = vmatmul.f32.gmra.mxu0 %v657
    %v676 = vpop.f32.mrf.mxu0
    %v677 = vadd.f32 0.0, %v676
    %678 = vdwg.mxu0
    %680 = vrot.lane.b32.xlu0 %v338, 120
    %v681 = vpop.permute.xlu0 %680
    %v684 = vsel %vm343, %v645, 0
    %686 = vmatpush.msra.mxu0 0.0
    %687 = vmatpush.msra.mxu0 0.0
    %688 = vmatpush.msra.mxu0 0.0
    %689 = vmatpush.msra.mxu0 0.0
    %690 = vmatpush.msra.mxu0 0.0
    %691 = vmatpush.msra.mxu0 0.0
    %692 = vmatpush.msra.mxu0 0.0
    %693 = vmatpush.msra.mxu0 0.0
    %694 = vmatpush.msra.mxu0 0.0
    %695 = vmatpush.msra.mxu0 0.0
    %696 = vmatpush.msra.mxu0 0.0
    %697 = vmatpush.msra.mxu0 0.0
    %698 = vmatpush.msra.mxu0 0.0
    %699 = vmatpush.msra.mxu0 0.0
    %700 = vmatpush.msra.mxu0 0.0
    %701 = vmatpush.msra.mxu0 %v681
    %702 = vmatmul.f32.gmra.mxu0 %v684
    %v703 = vpop.f32.mrf.mxu0
    %v704 = vadd.f32 0.0, %v703
    %705 = vdwg.mxu0
    %v707 = vsel %vm343, %v704, 0
    %709 = vmatpush.msra.mxu0 0.0
    %710 = vmatpush.msra.mxu0 0.0
    %711 = vmatpush.msra.mxu0 0.0
    %712 = vmatpush.msra.mxu0 0.0
    %713 = vmatpush.msra.mxu0 0.0
    %714 = vmatpush.msra.mxu0 0.0
    %715 = vmatpush.msra.mxu0 0.0
    %716 = vmatpush.msra.mxu0 0.0
    %717 = vmatpush.msra.mxu0 0.0
    %718 = vmatpush.msra.mxu0 0.0
    %719 = vmatpush.msra.mxu0 0.0
    %720 = vmatpush.msra.mxu0 0.0
    %721 = vmatpush.msra.mxu0 0.0
    %722 = vmatpush.msra.mxu0 0.0
    %723 = vmatpush.msra.mxu0 0.0
    %724 = vmatpush.msra.mxu0 %v653
    %725 = vmatmul.f32.gmra.mxu0 %v707
    %v726 = vpop.f32.mrf.mxu0
    %v727 = vadd.f32 0.0, %v726
    %728 = vdwg.mxu0
    %v730 = vsel %vm343, %v677, 0
    %732 = vmatpush.msra.mxu0 0.0
    %733 = vmatpush.msra.mxu0 0.0
    %734 = vmatpush.msra.mxu0 0.0
    %735 = vmatpush.msra.mxu0 0.0
    %736 = vmatpush.msra.mxu0 0.0
    %737 = vmatpush.msra.mxu0 0.0
    %738 = vmatpush.msra.mxu0 0.0
    %739 = vmatpush.msra.mxu0 0.0
    %740 = vmatpush.msra.mxu0 0.0
    %741 = vmatpush.msra.mxu0 0.0
    %742 = vmatpush.msra.mxu0 0.0
    %743 = vmatpush.msra.mxu0 0.0
    %744 = vmatpush.msra.mxu0 0.0
    %745 = vmatpush.msra.mxu0 0.0
    %746 = vmatpush.msra.mxu0 0.0
    %747 = vmatpush.msra.mxu0 %v652
    %748 = vmatmul.f32.gmra.mxu0 %v730
    %v749 = vpop.f32.mrf.mxu0
    %v750 = vadd.f32 %v727, %v749
    %751 = vdwg.mxu0
    %752 = vrot.lane.b32.xlu0 %v338, 112
    %v753 = vpop.permute.xlu0 %752
    %v756 = vsel %vm343, %v646, 0
    %758 = vmatpush.msra.mxu0 0.0
    %759 = vmatpush.msra.mxu0 0.0
    %760 = vmatpush.msra.mxu0 0.0
    %761 = vmatpush.msra.mxu0 0.0
    %762 = vmatpush.msra.mxu0 0.0
    %763 = vmatpush.msra.mxu0 0.0
    %764 = vmatpush.msra.mxu0 0.0
    %765 = vmatpush.msra.mxu0 0.0
    %766 = vmatpush.msra.mxu0 0.0
    %767 = vmatpush.msra.mxu0 0.0
    %768 = vmatpush.msra.mxu0 0.0
    %769 = vmatpush.msra.mxu0 0.0
    %770 = vmatpush.msra.mxu0 0.0
    %771 = vmatpush.msra.mxu0 0.0
    %772 = vmatpush.msra.mxu0 0.0
    %773 = vmatpush.msra.mxu0 %v753
    %774 = vmatmul.f32.gmra.mxu0 %v756
    %v775 = vpop.f32.mrf.mxu0
    %v776 = vadd.f32 0.0, %v775
    %777 = vdwg.mxu0
    %v779 = vsel %vm343, %v776, 0
    %781 = vmatpush.msra.mxu0 0.0
    %782 = vmatpush.msra.mxu0 0.0
    %783 = vmatpush.msra.mxu0 0.0
    %784 = vmatpush.msra.mxu0 0.0
    %785 = vmatpush.msra.mxu0 0.0
    %786 = vmatpush.msra.mxu0 0.0
    %787 = vmatpush.msra.mxu0 0.0
    %788 = vmatpush.msra.mxu0 0.0
    %789 = vmatpush.msra.mxu0 0.0
    %790 = vmatpush.msra.mxu0 0.0
    %791 = vmatpush.msra.mxu0 0.0
    %792 = vmatpush.msra.mxu0 0.0
    %793 = vmatpush.msra.mxu0 0.0
    %794 = vmatpush.msra.mxu0 0.0
    %795 = vmatpush.msra.mxu0 0.0
    %796 = vmatpush.msra.mxu0 %v654
    %797 = vmatmul.f32.gmra.mxu0 %v779
    %v798 = vpop.f32.mrf.mxu0
    %v799 = vadd.f32 0.0, %v798
    %800 = vdwg.mxu0
    %v801 = vadd.f32 %v750, %v799
    %802 = vrot.lane.b32.xlu0 %v338, 104
    %v803 = vpop.permute.xlu0 %802
    %v806 = vsel %vm343, %v647, 0
    %808 = vmatpush.msra.mxu0 0.0
    %809 = vmatpush.msra.mxu0 0.0
    %810 = vmatpush.msra.mxu0 0.0
    %811 = vmatpush.msra.mxu0 0.0
    %812 = vmatpush.msra.mxu0 0.0
    %813 = vmatpush.msra.mxu0 0.0
    %814 = vmatpush.msra.mxu0 0.0
    %815 = vmatpush.msra.mxu0 0.0
    %816 = vmatpush.msra.mxu0 0.0
    %817 = vmatpush.msra.mxu0 0.0
    %818 = vmatpush.msra.mxu0 0.0
    %819 = vmatpush.msra.mxu0 0.0
    %820 = vmatpush.msra.mxu0 0.0
    %821 = vmatpush.msra.mxu0 0.0
    %822 = vmatpush.msra.mxu0 0.0
    %823 = vmatpush.msra.mxu0 %v803
    %824 = vmatmul.f32.gmra.mxu0 %v806
    %v825 = vpop.f32.mrf.mxu0
    %v826 = vadd.f32 0.0, %v825
    %827 = vdwg.mxu0
    %v829 = vsel %vm343, %v826, 0
    %831 = vmatpush.msra.mxu0 0.0
    %832 = vmatpush.msra.mxu0 0.0
    %833 = vmatpush.msra.mxu0 0.0
    %834 = vmatpush.msra.mxu0 0.0
    %835 = vmatpush.msra.mxu0 0.0
    %836 = vmatpush.msra.mxu0 0.0
    %837 = vmatpush.msra.mxu0 0.0
    %838 = vmatpush.msra.mxu0 0.0
    %839 = vmatpush.msra.mxu0 0.0
    %840 = vmatpush.msra.mxu0 0.0
    %841 = vmatpush.msra.mxu0 0.0
    %842 = vmatpush.msra.mxu0 0.0
    %843 = vmatpush.msra.mxu0 0.0
    %844 = vmatpush.msra.mxu0 0.0
    %845 = vmatpush.msra.mxu0 0.0
    %846 = vmatpush.msra.mxu0 %v655
    %847 = vmatmul.f32.gmra.mxu0 %v829
    %v848 = vpop.f32.mrf.mxu0
    %v849 = vadd.f32 0.0, %v848
    %850 = vdwg.mxu0
    %v851 = vadd.f32 %v801, %v849
    %v853 = vsel %vm343, %v648, 0
    %855 = vmatpush.msra.mxu0 0.0
    %856 = vmatpush.msra.mxu0 0.0
    %857 = vmatpush.msra.mxu0 0.0
    %858 = vmatpush.msra.mxu0 0.0
    %859 = vmatpush.msra.mxu0 0.0
    %860 = vmatpush.msra.mxu0 0.0
    %861 = vmatpush.msra.mxu0 0.0
    %862 = vmatpush.msra.mxu0 0.0
    %863 = vmatpush.msra.mxu0 0.0
    %864 = vmatpush.msra.mxu0 0.0
    %865 = vmatpush.msra.mxu0 0.0
    %866 = vmatpush.msra.mxu0 0.0
    %867 = vmatpush.msra.mxu0 0.0
    %868 = vmatpush.msra.mxu0 0.0
    %869 = vmatpush.msra.mxu0 0.0
    %870 = vmatpush.msra.mxu0 %v341
    %871 = vmatmul.f32.gmra.mxu0 %v853
    %v872 = vpop.f32.mrf.mxu0
    %v873 = vadd.f32 0.0, %v872
    %874 = vdwg.mxu0
    %876 = vrot.lane.b32.xlu0 %v341, 120
    %v877 = vpop.permute.xlu0 %876
    %v880 = vsel %vm343, %v649, 0
    %882 = vmatpush.msra.mxu0 0.0
    %883 = vmatpush.msra.mxu0 0.0
    %884 = vmatpush.msra.mxu0 0.0
    %885 = vmatpush.msra.mxu0 0.0
    %886 = vmatpush.msra.mxu0 0.0
    %887 = vmatpush.msra.mxu0 0.0
    %888 = vmatpush.msra.mxu0 0.0
    %889 = vmatpush.msra.mxu0 0.0
    %890 = vmatpush.msra.mxu0 0.0
    %891 = vmatpush.msra.mxu0 0.0
    %892 = vmatpush.msra.mxu0 0.0
    %893 = vmatpush.msra.mxu0 0.0
    %894 = vmatpush.msra.mxu0 0.0
    %895 = vmatpush.msra.mxu0 0.0
    %896 = vmatpush.msra.mxu0 0.0
    %897 = vmatpush.msra.mxu0 %v877
    %898 = vmatmul.f32.gmra.mxu0 %v880
    %v899 = vpop.f32.mrf.mxu0
    %v900 = vadd.f32 0.0, %v899
    %901 = vdwg.mxu0
    %v903 = vsel %vm343, %v900, 0
    %905 = vmatpush.msra.mxu0 0.0
    %906 = vmatpush.msra.mxu0 0.0
    %907 = vmatpush.msra.mxu0 0.0
    %908 = vmatpush.msra.mxu0 0.0
    %909 = vmatpush.msra.mxu0 0.0
    %910 = vmatpush.msra.mxu0 0.0
    %911 = vmatpush.msra.mxu0 0.0
    %912 = vmatpush.msra.mxu0 0.0
    %913 = vmatpush.msra.mxu0 0.0
    %914 = vmatpush.msra.mxu0 0.0
    %915 = vmatpush.msra.mxu0 0.0
    %916 = vmatpush.msra.mxu0 0.0
    %917 = vmatpush.msra.mxu0 0.0
    %918 = vmatpush.msra.mxu0 0.0
    %919 = vmatpush.msra.mxu0 0.0
    %920 = vmatpush.msra.mxu0 %v653
    %921 = vmatmul.f32.gmra.mxu0 %v903
    %v922 = vpop.f32.mrf.mxu0
    %v923 = vadd.f32 0.0, %v922
    %924 = vdwg.mxu0
    %v926 = vsel %vm343, %v873, 0
    %928 = vmatpush.msra.mxu0 0.0
    %929 = vmatpush.msra.mxu0 0.0
    %930 = vmatpush.msra.mxu0 0.0
    %931 = vmatpush.msra.mxu0 0.0
    %932 = vmatpush.msra.mxu0 0.0
    %933 = vmatpush.msra.mxu0 0.0
    %934 = vmatpush.msra.mxu0 0.0
    %935 = vmatpush.msra.mxu0 0.0
    %936 = vmatpush.msra.mxu0 0.0
    %937 = vmatpush.msra.mxu0 0.0
    %938 = vmatpush.msra.mxu0 0.0
    %939 = vmatpush.msra.mxu0 0.0
    %940 = vmatpush.msra.mxu0 0.0
    %941 = vmatpush.msra.mxu0 0.0
    %942 = vmatpush.msra.mxu0 0.0
    %943 = vmatpush.msra.mxu0 %v652
    %944 = vmatmul.f32.gmra.mxu0 %v926
    %v945 = vpop.f32.mrf.mxu0
    %v946 = vadd.f32 %v923, %v945
    %947 = vdwg.mxu0
    %948 = vrot.lane.b32.xlu0 %v341, 112
    %v949 = vpop.permute.xlu0 %948
    %v952 = vsel %vm343, %v650, 0
    %954 = vmatpush.msra.mxu0 0.0
    %955 = vmatpush.msra.mxu0 0.0
    %956 = vmatpush.msra.mxu0 0.0
    %957 = vmatpush.msra.mxu0 0.0
    %958 = vmatpush.msra.mxu0 0.0
    %959 = vmatpush.msra.mxu0 0.0
    %960 = vmatpush.msra.mxu0 0.0
    %961 = vmatpush.msra.mxu0 0.0
    %962 = vmatpush.msra.mxu0 0.0
    %963 = vmatpush.msra.mxu0 0.0
    %964 = vmatpush.msra.mxu0 0.0
    %965 = vmatpush.msra.mxu0 0.0
    %966 = vmatpush.msra.mxu0 0.0
    %967 = vmatpush.msra.mxu0 0.0
    %968 = vmatpush.msra.mxu0 0.0
    %969 = vmatpush.msra.mxu0 %v949
    %970 = vmatmul.f32.gmra.mxu0 %v952
    %v971 = vpop.f32.mrf.mxu0
    %v972 = vadd.f32 0.0, %v971
    %973 = vdwg.mxu0
    %v975 = vsel %vm343, %v972, 0
    %977 = vmatpush.msra.mxu0 0.0
    %978 = vmatpush.msra.mxu0 0.0
    %979 = vmatpush.msra.mxu0 0.0
    %980 = vmatpush.msra.mxu0 0.0
    %981 = vmatpush.msra.mxu0 0.0
    %982 = vmatpush.msra.mxu0 0.0
    %983 = vmatpush.msra.mxu0 0.0
    %984 = vmatpush.msra.mxu0 0.0
    %985 = vmatpush.msra.mxu0 0.0
    %986 = vmatpush.msra.mxu0 0.0
    %987 = vmatpush.msra.mxu0 0.0
    %988 = vmatpush.msra.mxu0 0.0
    %989 = vmatpush.msra.mxu0 0.0
    %990 = vmatpush.msra.mxu0 0.0
    %991 = vmatpush.msra.mxu0 0.0
    %992 = vmatpush.msra.mxu0 %v654
    %993 = vmatmul.f32.gmra.mxu0 %v975
    %v994 = vpop.f32.mrf.mxu0
    %v995 = vadd.f32 0.0, %v994
    %996 = vdwg.mxu0
    %v997 = vadd.f32 %v946, %v995
    %998 = vrot.lane.b32.xlu0 %v341, 104
    %v999 = vpop.permute.xlu0 %998
    %v1002 = vsel %vm343, %v651, 0
    %1004 = vmatpush.msra.mxu0 0.0
    %1005 = vmatpush.msra.mxu0 0.0
    %1006 = vmatpush.msra.mxu0 0.0
    %1007 = vmatpush.msra.mxu0 0.0
    %1008 = vmatpush.msra.mxu0 0.0
    %1009 = vmatpush.msra.mxu0 0.0
    %1010 = vmatpush.msra.mxu0 0.0
    %1011 = vmatpush.msra.mxu0 0.0
    %1012 = vmatpush.msra.mxu0 0.0
    %1013 = vmatpush.msra.mxu0 0.0
    %1014 = vmatpush.msra.mxu0 0.0
    %1015 = vmatpush.msra.mxu0 0.0
    %1016 = vmatpush.msra.mxu0 0.0
    %1017 = vmatpush.msra.mxu0 0.0
    %1018 = vmatpush.msra.mxu0 0.0
    %1019 = vmatpush.msra.mxu0 %v999
    %1020 = vmatmul.f32.gmra.mxu0 %v1002
    %v1021 = vpop.f32.mrf.mxu0
    %v1022 = vadd.f32 0.0, %v1021
    %1023 = vdwg.mxu0
    %v1025 = vsel %vm343, %v1022, 0
    %1027 = vmatpush.msra.mxu0 0.0
    %1028 = vmatpush.msra.mxu0 0.0
    %1029 = vmatpush.msra.mxu0 0.0
    %1030 = vmatpush.msra.mxu0 0.0
    %1031 = vmatpush.msra.mxu0 0.0
    %1032 = vmatpush.msra.mxu0 0.0
    %1033 = vmatpush.msra.mxu0 0.0
    %1034 = vmatpush.msra.mxu0 0.0
    %1035 = vmatpush.msra.mxu0 0.0
    %1036 = vmatpush.msra.mxu0 0.0
    %1037 = vmatpush.msra.mxu0 0.0
    %1038 = vmatpush.msra.mxu0 0.0
    %1039 = vmatpush.msra.mxu0 0.0
    %1040 = vmatpush.msra.mxu0 0.0
    %1041 = vmatpush.msra.mxu0 0.0
    %1042 = vmatpush.msra.mxu0 %v655
    %1043 = vmatmul.f32.gmra.mxu0 %v1025
    %v1044 = vpop.f32.mrf.mxu0
    %v1045 = vadd.f32 0.0, %v1044
    %1046 = vdwg.mxu0
    %v1047 = vadd.f32 %v997, %v1045
    %v1048 = vld [vmem:[#allocation7] sm:$0x1]
    %v1050 = vperm.slane %v1048, 0
    %v1052 = vadd.f32 %v851, %v1050
    %v1053 = vadd.f32 %v1047, %v1050
    %v1054 = vadd.f32 %v163, %v1052
    %v1055 = vadd.f32 %v178, %v1053
    %v1056 = vld [vmem:[%s11] sm:$0x1]
    %v1057 = vld [vmem:[%s12] sm:$0x1]
    %v1058 = vsel %vm182, %v1054, 0.0
    %1059 = vadd.xlane.f32.xlu0 %v1058
    %v1060 = vpop.xlane.xlu0 %1059
    %v1061 = vsel %vm182, %v1055, 0.0
    %1062 = vadd.xlane.f32.xlu0 %v1061
    %v1063 = vpop.xlane.xlu0 %1062
    %v1064 = vmul.f32 %v1060, %v195
    %v1065 = vmul.f32 %v1063, %v195
    %v1066 = vsub.f32 %v1054, %v1064
    %v1067 = vsub.f32 %v1055, %v1065
    %v1068 = vmul.f32 %v1066, %v1066
    %v1069 = vmul.f32 %v1067, %v1067
    %v1070 = vsel %vm182, %v1068, 0.0
    %1071 = vadd.xlane.f32.xlu0 %v1070
    %v1072 = vpop.xlane.xlu0 %1071
    %v1073 = vsel %vm182, %v1069, 0.0
    %1074 = vadd.xlane.f32.xlu0 %v1073
    %v1075 = vpop.xlane.xlu0 %1074
    %v1076 = vmul.f32 %v1072, %v195
    %v1077 = vmul.f32 %v1075, %v195
    %v1078 = vadd.f32 %v1076, 1e-05
    %v1079 = vadd.f32 %v1077, 1e-05
    %v1080 = vrsqrt.pop %v1078
    %v1081 = vmul.f32 %v1080, %v1078
    %v1082 = vmul.f32 %v1081, %v1080
    %v1083 = vmul.f32 0.5, %v1082
    %v1084 = vsub.f32 1.5, %v1083
    %v1085 = vmul.f32 %v1080, %v1084
    %vm1086 = vweird.f32 %v1078
    %vm1087 = vweird.f32 %v1080
    %vm1088 = vmor %vm1086, %vm1087
    %v1089 = vsel %vm1088, %v1080, %v1085
    %v1090 = vrsqrt.pop %v1079
    %v1091 = vmul.f32 %v1090, %v1079
    %v1092 = vmul.f32 %v1091, %v1090
    %v1093 = vmul.f32 0.5, %v1092
    %v1094 = vsub.f32 1.5, %v1093
    %v1095 = vmul.f32 %v1090, %v1094
    %vm1096 = vweird.f32 %v1079
    %vm1097 = vweird.f32 %v1090
    %vm1098 = vmor %vm1096, %vm1097
    %v1099 = vsel %vm1098, %v1090, %v1095
    %v1100 = vmul.f32 %v1066, %v1089
    %v1101 = vmul.f32 %v1067, %v1099
    %v1103 = vperm.slane %v1056, 0
    %v1105 = vmul.f32 %v1100, %v1103
    %v1106 = vmul.f32 %v1101, %v1103
    %v1108 = vperm.slane %v1057, 0
    %v1110 = vadd.f32 %v1105, %v1108
    %v1111 = vadd.f32 %v1106, %v1108
    %v1112 = vld [vmem:[%s13] sm:$0xff]
    %v1113 = vld [vmem:[%s13 + $0x8] sm:$0xff]
    %v1114 = vld [vmem:[%s13 + $0x10] sm:$0xff]
    %v1115 = vld [vmem:[%s13 + $0x18] sm:$0xff]
    %v1116 = vld [vmem:[#allocation8] sm:$0x1]
    %v1118 = vperm.slane %v1116, 0
    %v1121 = vsel %vm182, %v1110, 0
    %v1124 = vsel %vm182, %v1111, 0
    %1126 = vmatpush.msra.mxu0 0.0
    %1127 = vmatpush.msra.mxu0 0.0
    %1128 = vmatpush.msra.mxu0 0.0
    %1129 = vmatpush.msra.mxu0 0.0
    %1130 = vmatpush.msra.mxu0 0.0
    %1131 = vmatpush.msra.mxu0 0.0
    %1132 = vmatpush.msra.mxu0 0.0
    %1133 = vmatpush.msra.mxu0 0.0
    %1134 = vmatpush.msra.mxu0 0.0
    %1135 = vmatpush.msra.mxu0 0.0
    %1136 = vmatpush.msra.mxu0 0.0
    %1137 = vmatpush.msra.mxu0 0.0
    %1138 = vmatpush.msra.mxu0 %v1115
    %1139 = vmatpush.msra.mxu0 %v1114
    %1140 = vmatpush.msra.mxu0 %v1113
    %1141 = vmatpush.msra.mxu0 %v1112
    %1142 = vmatmul.f32.gmra.mxu0 %v1121
    %v1143 = vpop.f32.mrf.mxu0
    %v1144 = vadd.f32 %v1118, %v1143
    %1145 = vmatmul.f32.gmra.mxu0 %v1124
    %v1146 = vpop.f32.mrf.mxu0
    %v1147 = vadd.f32 %v1118, %v1146
    %1148 = vdwg.mxu0
    %v1149 = vmul.f32 %v1144, 0.5
    %v1150 = vmul.f32 %v1147, 0.5
    %v1151 = vrcp.pop 1.4142135
    %v1152 = vmul.f32 1.4142135, %v1151
    %v1153 = vsub.f32 1.0, %v1152
    %v1154 = vmul.f32 %v1151, %v1153
    %v1155 = vadd.f32 %v1151, %v1154
    %vm1156 = vweird.f32 %v1151
    %v1157 = vsel %vm1156, %v1151, %v1155
    %v1158 = vmul.f32 %v1144, %v1157
    %v1159 = vmul.f32 %v1147, %v1157
    %v1160 = vmul.f32 %v1158, %v1158
    %v1161 = vmin.f32 16.0, %v1160
    %v1162 = vmul.f32 %v1161, 2.1237322e-06
    %v1163 = vadd.f32 %v1162, 0.00028619796
    %v1164 = vmul.f32 %v1161, %v1163
    %v1165 = vadd.f32 %v1164, 0.0036580483
    %v1166 = vmul.f32 %v1161, %v1165
    %v1167 = vadd.f32 %v1166, 0.05243302
    %v1168 = vmul.f32 %v1161, %v1167
    %v1169 = vadd.f32 %v1168, 0.18741608
    %v1170 = vmul.f32 %v1161, %v1169
    %v1171 = vadd.f32 %v1170, 1.1283791
    %v1172 = vmul.f32 %v1158, %v1171
    %v1173 = vmul.f32 %v1161, 3.8918573e-05
    %v1174 = vadd.f32 %v1173, 0.001143296
    %v1175 = vmul.f32 %v1161, %v1174
    %v1176 = vadd.f32 %v1175, 0.014752088
    %v1177 = vmul.f32 %v1161, %v1176
    %v1178 = vadd.f32 %v1177, 0.112945676
    %v1179 = vmul.f32 %v1161, %v1178
    %v1180 = vadd.f32 %v1179, 0.4994258
    %v1181 = vmul.f32 %v1161, %v1180
    %v1182 = vadd.f32 %v1181, 1.0
    %v1183 = vrcp.pop %v1182
    %v1184 = vmul.f32 %v1182, %v1183
    %v1185 = vsub.f32 1.0, %v1184
    %v1186 = vmul.f32 %v1183, %v1185
    %v1187 = vadd.f32 %v1183, %v1186
    %vm1188 = vweird.f32 %v1182
    %vm1189 = vweird.f32 %v1183
    %vm1190 = vmor %vm1188, %vm1189
    %v1191 = vsel %vm1190, %v1183, %v1187
    %v1192 = vand.u32 2147483647, %v1182
    %vm1193 = vcmp.eq.f32.partialorder %v1192, 8.507059e+37
    %v1194 = vand.u32 %v1182, 2147483648
    %v1195 = vor.u32 1.1754944e-38, %v1194
    %v1196 = vsel %vm1193, %v1195, %v1191
    %v1197 = vmul.f32 %v1172, %v1196
    %v1198 = vmin.f32 %v1197, 1.0
    %v1199 = vmax.f32 %v1198, -1.0
    %v1200 = vmul.f32 %v1159, %v1159
    %v1201 = vmin.f32 16.0, %v1200
    %v1202 = vmul.f32 %v1201, 2.1237322e-06
    %v1203 = vadd.f32 %v1202, 0.00028619796
    %v1204 = vmul.f32 %v1201, %v1203
    %v1205 = vadd.f32 %v1204, 0.0036580483
    %v1206 = vmul.f32 %v1201, %v1205
    %v1207 = vadd.f32 %v1206, 0.05243302
    %v1208 = vmul.f32 %v1201, %v1207
    %v1209 = vadd.f32 %v1208, 0.18741608
    %v1210 = vmul.f32 %v1201, %v1209
    %v1211 = vadd.f32 %v1210, 1.1283791
    %v1212 = vmul.f32 %v1159, %v1211
    %v1213 = vmul.f32 %v1201, 3.8918573e-05
    %v1214 = vadd.f32 %v1213, 0.001143296
    %v1215 = vmul.f32 %v1201, %v1214
    %v1216 = vadd.f32 %v1215, 0.014752088
    %v1217 = vmul.f32 %v1201, %v1216
    %v1218 = vadd.f32 %v1217, 0.112945676
    %v1219 = vmul.f32 %v1201, %v1218
    %v1220 = vadd.f32 %v1219, 0.4994258
    %v1221 = vmul.f32 %v1201, %v1220
    %v1222 = vadd.f32 %v1221, 1.0
    %v1223 = vrcp.pop %v1222
    %v1224 = vmul.f32 %v1222, %v1223
    %v1225 = vsub.f32 1.0, %v1224
    %v1226 = vmul.f32 %v1223, %v1225
    %v1227 = vadd.f32 %v1223, %v1226
    %vm1228 = vweird.f32 %v1222
    %vm1229 = vweird.f32 %v1223
    %vm1230 = vmor %vm1228, %vm1229
    %v1231 = vsel %vm1230, %v1223, %v1227
    %v1232 = vand.u32 2147483647, %v1222
    %vm1233 = vcmp.eq.f32.partialorder %v1232, 8.507059e+37
    %v1234 = vand.u32 %v1222, 2147483648
    %v1235 = vor.u32 1.1754944e-38, %v1234
    %v1236 = vsel %vm1233, %v1235, %v1231
    %v1237 = vmul.f32 %v1212, %v1236
    %v1238 = vmin.f32 %v1237, 1.0
    %v1239 = vmax.f32 %v1238, -1.0
    %v1240 = vadd.f32 %v1199, 1.0
    %v1241 = vadd.f32 %v1239, 1.0
    %v1242 = vmul.f32 %v1149, %v1240
    %v1243 = vmul.f32 %v1150, %v1241
    %v1244 = vld [vmem:[%s15] sm:$0xff]
    %v1245 = vld [vmem:[%s15 + $0x8] sm:$0xff]
    %v1246 = vld [vmem:[%s15 + $0x10] sm:$0xff]
    %v1247 = vld [vmem:[%s15 + $0x18] sm:$0xff]
    %v1248 = vld [vmem:[%s15 + $0x20] sm:$0xff]
    %v1249 = vld [vmem:[%s15 + $0x28] sm:$0xff]
    %v1250 = vld [vmem:[%s15 + $0x30] sm:$0xff]
    %v1251 = vld [vmem:[%s15 + $0x38] sm:$0xff]
    %v1252 = vld [vmem:[%s15 + $0x40] sm:$0xff]
    %v1253 = vld [vmem:[%s15 + $0x48] sm:$0xff]
    %v1254 = vld [vmem:[%s15 + $0x50] sm:$0xff]
    %v1255 = vld [vmem:[%s15 + $0x58] sm:$0xff]
    %v1256 = vld [vmem:[%s15 + $0x60] sm:$0xff]
    %v1257 = vld [vmem:[%s15 + $0x68] sm:$0xff]
    %v1258 = vld [vmem:[%s15 + $0x70] sm:$0xff]
    %v1259 = vld [vmem:[%s15 + $0x78] sm:$0xff]
    %v1260 = vld [vmem:[#allocation10] sm:$0x1]
    %v1262 = vperm.slane %v1260, 0
    %1264 = vmatpush.msra.mxu0 %v1259
    %1265 = vmatpush.msra.mxu0 %v1258
    %1266 = vmatpush.msra.mxu0 %v1257
    %1267 = vmatpush.msra.mxu0 %v1256
    %1268 = vmatpush.msra.mxu0 %v1255
    %1269 = vmatpush.msra.mxu0 %v1254
    %1270 = vmatpush.msra.mxu0 %v1253
    %1271 = vmatpush.msra.mxu0 %v1252
    %1272 = vmatpush.msra.mxu0 %v1251
    %1273 = vmatpush.msra.mxu0 %v1250
    %1274 = vmatpush.msra.mxu0 %v1249
    %1275 = vmatpush.msra.mxu0 %v1248
    %1276 = vmatpush.msra.mxu0 %v1247
    %1277 = vmatpush.msra.mxu0 %v1246
    %1278 = vmatpush.msra.mxu0 %v1245
    %1279 = vmatpush.msra.mxu0 %v1244
    %1280 = vmatmul.f32.gmra.mxu0 %v1242
    %v1281 = vpop.f32.mrf.mxu0
    %v1282 = vadd.f32 %v1262, %v1281
    %1283 = vmatmul.f32.gmra.mxu0 %v1243
    %v1284 = vpop.f32.mrf.mxu0
    %v1285 = vadd.f32 %v1262, %v1284
    %1286 = vdwg.mxu0
    %v1287 = vadd.f32 %v1054, %v1282
    %v1288 = vadd.f32 %v1055, %v1285
    %v1290 = vrot.slane %v1287, 1
    %v1291 = vrot.slane %v1287, 2
    %v1292 = vrot.slane %v1287, 3
    %v1293 = vrot.slane %v1287, 4
    %v1294 = vrot.slane %v1287, 5
    %v1295 = vrot.slane %v1287, 6
    %v1296 = vrot.slane %v1287, 7
    %v1305 = vrot.slane %v1288, 1
    %v1306 = vrot.slane %v1288, 2
    %v1307 = vrot.slane %v1288, 3
    %v1308 = vrot.slane %v1288, 4
    %v1309 = vrot.slane %v1288, 5
    %v1310 = vrot.slane %v1288, 6
    %v1311 = vrot.slane %v1288, 7
    %v1312 = vperm.slane %v1288, 0
    %v1313 = vperm.slane %v1305, 0
    %v1314 = vperm.slane %v1306, 0
    %v1315 = vperm.slane %v1307, 0
    %v1316 = vperm.slane %v1308, 0
    %v1317 = vperm.slane %v1309, 0
    %v1318 = vperm.slane %v1310, 0
    %v1319 = vperm.slane %v1311, 0
    %vm1328 = vcmask 1040384
    %v1329 = vsel %vm1328, %v1287, %v1312
    %v1330 = vsel %vm1328, %v1290, %v1313
    %v1331 = vsel %vm1328, %v1291, %v1314
    %v1332 = vsel %vm1328, %v1292, %v1315
    %v1333 = vsel %vm1328, %v1293, %v1316
    %v1334 = vsel %vm1328, %v1294, %v1317
    %v1335 = vsel %vm1328, %v1295, %v1318
    %v1336 = vsel %vm1328, %v1296, %v1319
    %vm1337 = vcmask 254976
    %1338 = vst.msk [vmem:[#allocation11] sm:$0x3] %vm1337, %v1329
    %1339 = vst.msk [vmem:[#allocation11 + $0x2] sm:$0x3] %vm1337, %v1330
    %1340 = vst.msk [vmem:[#allocation11 + $0x4] sm:$0x3] %vm1337, %v1331
    %1341 = vst.msk [vmem:[#allocation11 + $0x6] sm:$0x3] %vm1337, %v1332
    %1342 = vst.msk [vmem:[#allocation11 + $0x8] sm:$0x3] %vm1337, %v1333
    %1343 = vst.msk [vmem:[#allocation11 + $0xa] sm:$0x3] %vm1337, %v1334
    %1344 = vst.msk [vmem:[#allocation11 + $0xc] sm:$0x3] %vm1337, %v1335
    %1345 = vst.msk [vmem:[#allocation11 + $0xe] sm:$0x3] %vm1337, %v1336
    // Predicated region
    $region90: #{residual_attention_block.1} parent=1 // pred_check
      _
    $region91: #{residual_attention_block.1} parent=1 // pred_check_branch
      %1347 = sbr.rel (0) target = $region93
    $region92: #{residual_attention_block.1} parent=1 // pred_region
      %1349 = vsyncadd [#allocation4], 0
      %s1350 = sshll.u32 [#allocation11], 4
      %s1351 = int_to_ptr.vmem [resolvable:$true] %s1350
      %s1352 = sshll.u32 %s17, 4
      %s1353 = int_to_ptr.hbm [resolvable:$true] %s1352
      %1358 = dma.vmem_to_hbm [thread:$0]  %s1351, 256, %s1353, [#allocation4], 32, 32, 2
    $region93: #{residual_attention_block.1} parent=1 // pred_fallthru
      _
    // Predicated region
    $region94: #{residual_attention_block.1} parent=1 // pred_check
      _
    $region95: #{residual_attention_block.1} parent=1 // pred_check_branch
      %1360 = sbr.rel (0) target = $region97
    $region96: #{residual_attention_block.1} parent=1 // pred_region
      %1362 = dma.done [#allocation4], 256
    $region97: #{residual_attention_block.1} parent=1 // pred_fallthru
      _
    %1363 = vsyncpa [#allocation3], 1
    %1364 = vsyncpa [#allocation6], 1
    %1365 = vsyncpa [#allocation9], 1
    %1366 = vsyncpa [#allocation4], 1

</llo_original>
